<compile_context>
chip_gen: v7x
topology: tpu7x:2x2x1
jax: 0.10.0
libtpu: 0.0.40
codegen_flags: <defaults>
</compile_context>

<pallas_src>
import functools

import jax
import jax.numpy as jnp
import numpy as np
from jax.experimental import pallas as pl
from jax.experimental.pallas import tpu as pltpu


def _round_up(x, m):
    return ((x + m - 1) // m) * m


def _neg_max_cross_cov_kernel(xp_ref, xl_ref, fwd_ref, inv_ref, out_ref, *,
                              f_pad, fb_pad):
    xp = xp_ref[...]                                   # [TM, N] f32
    xl = xl_ref[...]                                   # [TM, N] f32
    tm = xp.shape[0]

    # zero-mean along time (dim=3 in the torch code), in f32
    xp = xp - jnp.mean(xp, axis=-1, keepdims=True)
    xl = xl - jnp.mean(xl, axis=-1, keepdims=True)

    # Stack preds/labels rows so the forward-DFT weights go through the MXU
    # once per grid step; single-pass bf16 matmul, f32 accumulation.
    xs = jnp.concatenate([xp, xl], axis=0).astype(jnp.bfloat16)    # [2*TM, N]
    f = jnp.dot(xs, fwd_ref[...],
                preferred_element_type=jnp.float32)                # [2*TM, 2*F_pad]

    pf = f[:tm, :]                                     # sublane slice (TM % 8 == 0)
    lf = f[tm:, :]
    pr, pi = pf[:, :f_pad], pf[:, f_pad:]              # lane-aligned (F_pad % 128 == 0)
    lr, li = lf[:, :f_pad], lf[:, f_pad:]

    # X = preds_fft * conj(labels_fft); band bins occupy columns [0, fb_pad).
    x_re = pr * lr + pi * li
    x_im = pi * lr - pr * li

    mag = jnp.sqrt(x_re * x_re + x_im * x_im)
    total_energy = jnp.sum(mag, axis=-1, keepdims=True)            # use + zero
    use_energy = jnp.sum(mag[:, :fb_pad], axis=-1, keepdims=True)

    # Band-pruned irfft fused into a single matmul (out-of-band bins are zeroed
    # in the torch code, so they contribute nothing).  Half-spectrum weights,
    # 1/padded_N and 1/(min_N - 1) are folded into inv_ref host-side.
    xb = jnp.concatenate([x_re[:, :fb_pad], x_im[:, :fb_pad]],
                         axis=-1).astype(jnp.bfloat16)              # [TM, 2*fb_pad]
    cc = jnp.dot(xb, inv_ref[...],
                 preferred_element_type=jnp.float32)                # [TM, Np_pad]

    max_cc = jnp.max(cc, axis=-1, keepdims=True)
    # max_cc / (use/total) == max_cc * total * (1/use); clamp so all-zero
    # (padded) rows give 0 instead of NaN.  Reciprocal runs on the EUP slot.
    inv_use = pl.reciprocal(jnp.maximum(use_energy, 1e-30), approx=True)
    out_ref[...] = -(max_cc * total_energy) * inv_use               # [TM, 1]


def _build_constants(n, padded_n, n_freq, fs, high_pass, low_pass, min_n):
    freqs = np.linspace(0.0, fs / 2.0, n_freq)
    use = np.logical_and(freqs <= high_pass / 60.0, freqs >= low_pass / 60.0)
    band_idx = np.nonzero(use)[0]
    other_idx = np.nonzero(~use)[0]
    assert band_idx.size > 0, "empty frequency band (check fs / high_pass / low_pass)"

    fb = int(band_idx.size)
    fb_pad = _round_up(fb, 128)
    f_pad = _round_up(fb_pad + int(other_idx.size), 128)
    np_pad = _round_up(padded_n, 128)

    # Column permutation of the half-spectrum: band bins first (lane-aligned at
    # column 0), zero columns up to fb_pad, then the remaining bins, then zero
    # columns up to F_pad.  All in-kernel slices become 128-aligned views.
    col_bins = np.full(f_pad, -1, dtype=np.int64)
    col_bins[:fb] = band_idx
    col_bins[fb_pad:fb_pad + other_idx.size] = other_idx
    col_mask = (col_bins >= 0)[None, :]
    kcols = np.where(col_bins < 0, 0, col_bins)[None, :]

    # Fused forward DFT matrix [N, 2*F_pad] = [cos | -sin]; zero padding of the
    # input to 2N only appends zeros, so only the first N DFT rows matter.
    nrow = np.arange(n)[:, None]
    ang = 2.0 * np.pi * nrow * kcols / padded_n
    fwd = np.concatenate([np.where(col_mask, np.cos(ang), 0.0),
                          np.where(col_mask, -np.sin(ang), 0.0)],
                         axis=1).astype(np.float32)                 # [N, 2*F_pad]

    # Fused, band-pruned inverse DFT [2*fb_pad, Np_pad]: rows [0, fb) act on
    # Re(X), rows [fb_pad, fb_pad+fb) on Im(X).  Lag columns past padded_n
    # duplicate earlier lags, so the per-row max is unchanged.
    lag = (np.arange(np_pad) % padded_n)[None, :]
    kk = band_idx[:, None]
    ang2 = 2.0 * np.pi * kk * lag / padded_n
    w = np.where((kk == 0) | (kk == padded_n // 2), 1.0, 2.0)
    scale = 1.0 / (padded_n * (min_n - 1))
    inv = np.zeros((2 * fb_pad, np_pad), dtype=np.float32)
    inv[:fb, :] = w * np.cos(ang2) * scale
    inv[fb_pad:fb_pad + fb, :] = -w * np.sin(ang2) * scale

    return fwd, inv, f_pad, fb_pad, np_pad


def _vmem_info():
    try:
        phys = int(pltpu.get_tpu_info().vmem_capacity_bytes)
    except Exception:
        phys = 64 << 20                    # conservative (v7x per-TensorCore)
    # Never budget the full physical VMEM: leave headroom for Mosaic scratch.
    budget = min(int(phys * 0.75), phys - (8 << 20))
    return phys, max(budget, 16 << 20)


def _choose_tm(m, tm_cap):
    tm_cap = max(8, (tm_cap // 8) * 8)

    def tm_for(steps):
        return max(8, min(tm_cap, _round_up(-(-m // steps), 8)))

    steps = max(2, -(-m // tm_cap))        # >= 2 grid steps when possible
    tm = tm_for(steps)
    actual = -(-m // tm)
    # Keep the grid-step count even when it is small: the single "parallel"
    # axis is sharded across v7x's two TensorCores.
    if actual % 2 and 1 < actual < 8:
        tm_even = tm_for(actual + 1)
        if -(-m // tm_even) % 2 == 0:
            tm = tm_even
    return tm


def negative_max_cross_cov(preds, labels, fs, high_pass, low_pass):
    # TODO(synk): unequal-length preds/labels (min_N/max_N padding in the torch
    # code) are not supported; the kernel assumes both have N time samples.
    assert preds.shape == labels.shape, "kernel supports equal-length preds/labels"
    B, C, H, N = preds.shape
    min_n = N
    padded_n = 2 * N
    n_freq = padded_n // 2 + 1

    fwd_np, inv_np, f_pad, fb_pad, np_pad = _build_constants(
        N, padded_n, n_freq, fs, high_pass, low_pass, min_n)

    # bf16 constants: single-pass MXU matmuls and half the constant VMEM.
    fwd = jnp.asarray(fwd_np, dtype=jnp.bfloat16)
    inv = jnp.asarray(inv_np, dtype=jnp.bfloat16)

    # --- per-generation VMEM budget -> row tile --------------------------------
    phys_vmem, budget = _vmem_info()
    tm_max = 512 if phys_vmem >= (96 << 20) else 256       # v5e/v6e vs v7x
    const_bytes = 2 * (fwd_np.size + inv_np.size)          # bf16, single-buffered
    per_row_bytes = (4 * (4 * N              # double-buffered f32 input tiles
                          + 2 * N            # centered f32 copies
                          + 4 * f_pad        # pf + lf (f32)
                          + 3 * f_pad        # x_re, x_im, mag (f32)
                          + np_pad)          # cc (f32)
                     + 2 * (2 * N + 2 * fb_pad))   # bf16 temporaries
    avail = budget - const_bytes - (2 << 20)
    # TODO(synk): if the constants alone exceed the budget (very large N on v7x),
    # tile the frequency axis with a second "arbitrary" grid dimension and
    # accumulate partial energies/band coefficients instead of shrinking tm.
    tm_vmem = max(8, (avail // int(per_row_bytes * 1.5)) if avail > 0 else 8)
    tm_cap = min(tm_max, tm_vmem)

    M = B * C * H
    tm = _choose_tm(M, tm_cap)
    m_pad = _round_up(M, tm)

    xp = preds.reshape(M, N).astype(jnp.float32)
    xl = labels.reshape(M, N).astype(jnp.float32)
    if m_pad != M:
        xp = jnp.pad(xp, ((0, m_pad - M), (0, 0)))
        xl = jnp.pad(xl, ((0, m_pad - M), (0, 0)))

    kernel = functools.partial(_neg_max_cross_cov_kernel,
                               f_pad=f_pad, fb_pad=fb_pad)

    def build_call(single_buffer_consts):
        def const_spec(shape):
            if single_buffer_consts:
                # Grid-invariant constants: one VMEM buffer is enough.
                return pl.BlockSpec(shape, lambda i: (0, 0),
                                    pipeline_mode=pl.Buffered(1))
            return pl.BlockSpec(shape, lambda i: (0, 0))

        return pl.pallas_call(
            kernel,
            out_shape=jax.ShapeDtypeStruct((m_pad, 1), jnp.float32),
            grid=(m_pad // tm,),
            in_specs=[
                pl.BlockSpec((tm, N), lambda i: (i, 0)),      # preds rows
                pl.BlockSpec((tm, N), lambda i: (i, 0)),      # labels rows
                const_spec((N, 2 * f_pad)),                   # fused fwd DFT
                const_spec((2 * fb_pad, np_pad)),             # fused inv DFT (band)
            ],
            out_specs=pl.BlockSpec((tm, 1), lambda i: (i, 0)),
            compiler_params=pltpu.CompilerParams(
                dimension_semantics=("parallel",),
                vmem_limit_bytes=int(budget)),
        )

    try:
        out = build_call(True)(xp, xl, fwd, inv)
    except Exception:
        # Fallback for jax versions without BlockSpec.pipeline_mode /
        # pl.Buffered(1): default double-buffered constants.  Any genuine
        # kernel error re-raises from this path as well.
        out = build_call(False)(xp, xl, fwd, inv)

    return out[:M, 0].reshape(B, C, H)


def negative_max_cross_cov_reference(preds, labels, fs, high_pass, low_pass):
    """Pure-JAX mirror of the torch forward for correctness checking."""
    preds_norm = preds - jnp.mean(preds, axis=3, keepdims=True)
    labels_norm = labels - jnp.mean(labels, axis=3, keepdims=True)
    min_n = min(preds.shape[-1], labels.shape[-1])
    padded_n = max(preds.shape[-1], labels.shape[-1]) * 2
    pad_p = ((0, 0),) * 3 + ((0, padded_n - preds.shape[-1]),)
    pad_l = ((0, 0),) * 3 + ((0, padded_n - labels.shape[-1]),)
    pf = jnp.fft.rfft(jnp.pad(preds_norm, pad_p), axis=-1)
    lf = jnp.fft.rfft(jnp.pad(labels_norm, pad_l), axis=-1)
    X = pf * jnp.conj(lf)
    freqs = jnp.linspace(0.0, fs / 2.0, X.shape[-1])
    use = jnp.logical_and(freqs <= high_pass / 60.0, freqs >= low_pass / 60.0)
    mag = jnp.abs(X)
    use_energy = jnp.sum(jnp.where(use, mag, 0.0), axis=-1)
    zero_energy = jnp.sum(jnp.where(use, 0.0, mag), axis=-1)
    energy_ratio = use_energy / (use_energy + zero_energy)
    Xz = jnp.where(use, X, 0.0 + 0.0j)
    cc = jnp.fft.irfft(Xz, axis=-1) / (min_n - 1)
    max_cc = jnp.max(cc, axis=-1) / energy_ratio
    return -max_cc


if __name__ == "__main__":
    key = jax.random.PRNGKey(0)
    k1, k2 = jax.random.split(key)

    B, C, H, N = 2, 3, 4, 16
    preds = jax.random.normal(k1, (B, C, H, N), dtype=jnp.float32)
    labels = jax.random.normal(k2, (B, C, H, N), dtype=jnp.float32)

    fs = 30.0           # sampling rate (Hz)
    high_pass = 250.0   # bpm, as in the module __init__
    low_pass = 40.0     # bpm

    out = negative_max_cross_cov(preds, labels, fs, high_pass, low_pass)
    out = jax.block_until_ready(out)

    ref = negative_max_cross_cov_reference(preds, labels, fs, high_pass, low_pass)
    ref = jax.block_until_ready(ref)

    assert out.shape == (B, C, H), f"bad output shape {out.shape}"
    # Tolerance loosened vs. the f32 FFT reference because the DFT matmuls now
    # run as single-pass bf16 on the MXU (~1% typical relative error).
    if not np.allclose(np.asarray(out), np.asarray(ref), rtol=5e-2, atol=5e-3):
        err = np.max(np.abs(np.asarray(out) - np.asarray(ref)))
        raise AssertionError(f"Pallas kernel does not match reference (max abs err {err})")

    print("KERNEL_OK")
</pallas_src>

<mosaic_0001>
module attributes {stable_mosaic.version = 11 : i64} {
  func.func @_neg_max_cross_cov_kernel(%arg0: i32, %arg1: memref<16x16xf32, #tpu.memory_space<vmem>>, %arg2: memref<16x16xf32, #tpu.memory_space<vmem>>, %arg3: memref<16x512xbf16, #tpu.memory_space<vmem>>, %arg4: memref<256x128xbf16, #tpu.memory_space<vmem>>, %arg5: memref<16x1xf32, #tpu.memory_space<vmem>>) attributes {dimension_semantics = [#tpu.dimension_semantics<parallel>], iteration_bounds = array<i64: 2>, scalar_prefetch = 0 : i64, scratch_operands = 0 : i64, tpu.core_type = #tpu.core_type<tc>, window_params = [{transform_indices = @transform_0, window_bounds = array<i64: 16, 16>}, {transform_indices = @transform_1, window_bounds = array<i64: 16, 16>}, {pipeline_mode = #tpu.pipeline_mode<synchronous>, transform_indices = @transform_2, window_bounds = array<i64: 16, 512>}, {pipeline_mode = #tpu.pipeline_mode<synchronous>, transform_indices = @transform_3, window_bounds = array<i64: 256, 128>}, {transform_indices = @transform_4, window_bounds = array<i64: 16, 1>}]} {
    %c0 = arith.constant 0 : index
    %c0_0 = arith.constant 0 : index
    %0 = vector.load %arg1[%c0, %c0_0] : memref<16x16xf32, #tpu.memory_space<vmem>>, vector<16x16xf32>
    %c0_1 = arith.constant 0 : index
    %c0_2 = arith.constant 0 : index
    %1 = vector.load %arg2[%c0_1, %c0_2] : memref<16x16xf32, #tpu.memory_space<vmem>>, vector<16x16xf32>
    %cst = arith.constant dense<0.000000e+00> : vector<16xf32>
    %2 = vector.multi_reduction <add>, %0, %cst [1] : vector<16x16xf32> to vector<16xf32>
    %3 = vector.shape_cast %2 : vector<16xf32> to vector<16x1xf32>
    %cst_3 = arith.constant 1.600000e+01 : f32
    %4 = vector.broadcast %cst_3 : f32 to vector<16x1xf32>
    %5 = arith.divf %3, %4 : vector<16x1xf32>
    %6 = vector.broadcast %5 : vector<16x1xf32> to vector<16x16xf32>
    %7 = arith.subf %0, %6 : vector<16x16xf32>
    %cst_4 = arith.constant dense<0.000000e+00> : vector<16xf32>
    %8 = vector.multi_reduction <add>, %1, %cst_4 [1] : vector<16x16xf32> to vector<16xf32>
    %9 = vector.shape_cast %8 : vector<16xf32> to vector<16x1xf32>
    %cst_5 = arith.constant 1.600000e+01 : f32
    %10 = vector.broadcast %cst_5 : f32 to vector<16x1xf32>
    %11 = arith.divf %9, %10 : vector<16x1xf32>
    %12 = vector.broadcast %11 : vector<16x1xf32> to vector<16x16xf32>
    %13 = arith.subf %1, %12 : vector<16x16xf32>
    %14 = tpu.concatenate %7, %13 in 0 : vector<16x16xf32>, vector<16x16xf32> -> vector<32x16xf32>
    %15 = arith.truncf %14 : vector<32x16xf32> to vector<32x16xbf16>
    %c0_6 = arith.constant 0 : index
    %c0_7 = arith.constant 0 : index
    %16 = vector.load %arg3[%c0_6, %c0_7] : memref<16x512xbf16, #tpu.memory_space<vmem>>, vector<16x512xbf16>
    %cst_8 = arith.constant dense<0.000000e+00> : vector<32x512xf32>
    %17 = tpu.matmul %15, %16, %cst_8 {dimension_numbers = #tpu.dot_dimension_numbers<[1], [0], [0], [1], [0, 0, 1, 1], [], []>} : vector<32x16xbf16>, vector<16x512xbf16>, vector<32x512xf32> -> vector<32x512xf32>
    %18 = vector.extract_strided_slice %17 {offsets = [0, 0], sizes = [16, 512], strides = [1, 1]} : vector<32x512xf32> to vector<16x512xf32>
    %19 = vector.extract_strided_slice %17 {offsets = [16, 0], sizes = [16, 512], strides = [1, 1]} : vector<32x512xf32> to vector<16x512xf32>
    %20 = vector.extract_strided_slice %18 {offsets = [0, 0], sizes = [16, 256], strides = [1, 1]} : vector<16x512xf32> to vector<16x256xf32>
    %21 = vector.extract_strided_slice %18 {offsets = [0, 256], sizes = [16, 256], strides = [1, 1]} : vector<16x512xf32> to vector<16x256xf32>
    %22 = vector.extract_strided_slice %19 {offsets = [0, 0], sizes = [16, 256], strides = [1, 1]} : vector<16x512xf32> to vector<16x256xf32>
    %23 = vector.extract_strided_slice %19 {offsets = [0, 256], sizes = [16, 256], strides = [1, 1]} : vector<16x512xf32> to vector<16x256xf32>
    %24 = arith.mulf %20, %22 : vector<16x256xf32>
    %25 = arith.mulf %21, %23 : vector<16x256xf32>
    %26 = arith.addf %24, %25 : vector<16x256xf32>
    %27 = arith.mulf %21, %22 : vector<16x256xf32>
    %28 = arith.mulf %20, %23 : vector<16x256xf32>
    %29 = arith.subf %27, %28 : vector<16x256xf32>
    %30 = arith.mulf %26, %26 : vector<16x256xf32>
    %31 = arith.mulf %29, %29 : vector<16x256xf32>
    %32 = arith.addf %30, %31 : vector<16x256xf32>
    %33 = math.sqrt %32 : vector<16x256xf32>
    %cst_9 = arith.constant dense<0.000000e+00> : vector<16xf32>
    %34 = vector.multi_reduction <add>, %33, %cst_9 [1] : vector<16x256xf32> to vector<16xf32>
    %35 = vector.shape_cast %34 : vector<16xf32> to vector<16x1xf32>
    %36 = vector.extract_strided_slice %33 {offsets = [0, 0], sizes = [16, 128], strides = [1, 1]} : vector<16x256xf32> to vector<16x128xf32>
    %cst_10 = arith.constant dense<0.000000e+00> : vector<16xf32>
    %37 = vector.multi_reduction <add>, %36, %cst_10 [1] : vector<16x128xf32> to vector<16xf32>
    %38 = vector.shape_cast %37 : vector<16xf32> to vector<16x1xf32>
    %39 = vector.extract_strided_slice %26 {offsets = [0, 0], sizes = [16, 128], strides = [1, 1]} : vector<16x256xf32> to vector<16x128xf32>
    %40 = vector.extract_strided_slice %29 {offsets = [0, 0], sizes = [16, 128], strides = [1, 1]} : vector<16x256xf32> to vector<16x128xf32>
    %41 = tpu.concatenate %39, %40 in 1 : vector<16x128xf32>, vector<16x128xf32> -> vector<16x256xf32>
    %42 = arith.truncf %41 : vector<16x256xf32> to vector<16x256xbf16>
    %c0_11 = arith.constant 0 : index
    %c0_12 = arith.constant 0 : index
    %43 = vector.load %arg4[%c0_11, %c0_12] : memref<256x128xbf16, #tpu.memory_space<vmem>>, vector<256x128xbf16>
    %cst_13 = arith.constant dense<0.000000e+00> : vector<16x128xf32>
    %44 = tpu.matmul %42, %43, %cst_13 {dimension_numbers = #tpu.dot_dimension_numbers<[1], [0], [0], [1], [0, 0, 1, 1], [], []>} : vector<16x256xbf16>, vector<256x128xbf16>, vector<16x128xf32> -> vector<16x128xf32>
    %cst_14 = arith.constant dense<0xFF800000> : vector<16xf32>
    %45 = vector.multi_reduction <maximumf>, %44, %cst_14 [1] : vector<16x128xf32> to vector<16xf32>
    %46 = vector.shape_cast %45 : vector<16xf32> to vector<16x1xf32>
    %cst_15 = arith.constant 1.000000e-30 : f32
    %47 = vector.broadcast %cst_15 : f32 to vector<16x1xf32>
    %48 = arith.maximumf %38, %47 : vector<16x1xf32>
    %49 = tpu.reciprocal %48 {approx = true} : vector<16x1xf32> -> vector<16x1xf32>
    %50 = arith.mulf %46, %35 : vector<16x1xf32>
    %cst_16 = arith.constant 0.000000e+00 : f32
    %51 = vector.broadcast %cst_16 : f32 to vector<16x1xf32>
    %52 = arith.subf %51, %50 : vector<16x1xf32>
    %53 = arith.mulf %52, %49 : vector<16x1xf32>
    %c0_17 = arith.constant 0 : index
    %c0_18 = arith.constant 0 : index
    %54 = vector.load %arg5[%c0_17, %c0_18] : memref<16x1xf32, #tpu.memory_space<vmem>>, vector<16x1xf32>
    tpu.vector_store %arg5[%c0_17, %c0_18], %53 {strides = array<i32>} : memref<16x1xf32, #tpu.memory_space<vmem>>, vector<16x1xf32>,
    return
  }
  func.func @transform_0(%arg0: i32) -> (i32, i32) {
    %c0_i32 = arith.constant 0 : i32
    %c0_i32_0 = arith.constant 0 : i32
    return %arg0, %c0_i32 : i32, i32
  }
  func.func @transform_1(%arg0: i32) -> (i32, i32) {
    %c0_i32 = arith.constant 0 : i32
    %c0_i32_0 = arith.constant 0 : i32
    return %arg0, %c0_i32 : i32, i32
  }
  func.func @transform_2(%arg0: i32) -> (i32, i32) {
    %c0_i32 = arith.constant 0 : i32
    %c0_i32_0 = arith.constant 0 : i32
    %c0_i32_1 = arith.constant 0 : i32
    return %c0_i32, %c0_i32_0 : i32, i32
  }
  func.func @transform_3(%arg0: i32) -> (i32, i32) {
    %c0_i32 = arith.constant 0 : i32
    %c0_i32_0 = arith.constant 0 : i32
    %c0_i32_1 = arith.constant 0 : i32
    return %c0_i32, %c0_i32_0 : i32, i32
  }
  func.func @transform_4(%arg0: i32) -> (i32, i32) {
    %c0_i32 = arith.constant 0 : i32
    %c0_i32_0 = arith.constant 0 : i32
    return %arg0, %c0_i32 : i32, i32
  }
}

module attributes {stable_mosaic.version = 11 : i64} {
  func.func @_neg_max_cross_cov_kernel(%arg0: i32, %arg1: memref<16x16xf32, #tpu.memory_space<vmem>>, %arg2: memref<16x16xf32, #tpu.memory_space<vmem>>, %arg3: memref<16x512xbf16, #tpu.memory_space<vmem>>, %arg4: memref<256x128xbf16, #tpu.memory_space<vmem>>, %arg5: memref<16x1xf32, #tpu.memory_space<vmem>>) attributes {dimension_semantics = [#tpu.dimension_semantics<parallel>], iteration_bounds = array<i64: 2>, scalar_prefetch = 0 : i64, scratch_operands = 0 : i64, tpu.core_type = #tpu.core_type<tc>, window_params = [{transform_indices = @transform_0, window_bounds = array<i64: 16, 16>}, {transform_indices = @transform_1, window_bounds = array<i64: 16, 16>}, {pipeline_mode = #tpu.pipeline_mode<synchronous>, transform_indices = @transform_2, window_bounds = array<i64: 16, 512>}, {pipeline_mode = #tpu.pipeline_mode<synchronous>, transform_indices = @transform_3, window_bounds = array<i64: 256, 128>}, {transform_indices = @transform_4, window_bounds = array<i64: 16, 1>}]} {
    %c0 = arith.constant 0 : index
    %c0_0 = arith.constant 0 : index
    %0 = vector.load %arg1[%c0, %c0_0] : memref<16x16xf32, #tpu.memory_space<vmem>>, vector<16x16xf32>
    %c0_1 = arith.constant 0 : index
    %c0_2 = arith.constant 0 : index
    %1 = vector.load %arg2[%c0_1, %c0_2] : memref<16x16xf32, #tpu.memory_space<vmem>>, vector<16x16xf32>
    %cst = arith.constant dense<0.000000e+00> : vector<16xf32>
    %2 = vector.multi_reduction <add>, %0, %cst [1] : vector<16x16xf32> to vector<16xf32>
    %3 = vector.shape_cast %2 : vector<16xf32> to vector<16x1xf32>
    %cst_3 = arith.constant 1.600000e+01 : f32
    %4 = vector.broadcast %cst_3 : f32 to vector<16x1xf32>
    %5 = arith.divf %3, %4 : vector<16x1xf32>
    %6 = vector.broadcast %5 : vector<16x1xf32> to vector<16x16xf32>
    %7 = arith.subf %0, %6 : vector<16x16xf32>
    %cst_4 = arith.constant dense<0.000000e+00> : vector<16xf32>
    %8 = vector.multi_reduction <add>, %1, %cst_4 [1] : vector<16x16xf32> to vector<16xf32>
    %9 = vector.shape_cast %8 : vector<16xf32> to vector<16x1xf32>
    %cst_5 = arith.constant 1.600000e+01 : f32
    %10 = vector.broadcast %cst_5 : f32 to vector<16x1xf32>
    %11 = arith.divf %9, %10 : vector<16x1xf32>
    %12 = vector.broadcast %11 : vector<16x1xf32> to vector<16x16xf32>
    %13 = arith.subf %1, %12 : vector<16x16xf32>
    %14 = tpu.concatenate %7, %13 in 0 : vector<16x16xf32>, vector<16x16xf32> -> vector<32x16xf32>
    %15 = arith.truncf %14 : vector<32x16xf32> to vector<32x16xbf16>
    %c0_6 = arith.constant 0 : index
    %c0_7 = arith.constant 0 : index
    %16 = vector.load %arg3[%c0_6, %c0_7] : memref<16x512xbf16, #tpu.memory_space<vmem>>, vector<16x512xbf16>
    %cst_8 = arith.constant dense<0.000000e+00> : vector<32x512xf32>
    %17 = tpu.matmul %15, %16, %cst_8 {dimension_numbers = #tpu.dot_dimension_numbers<[1], [0], [0], [1], [0, 0, 1, 1], [], []>} : vector<32x16xbf16>, vector<16x512xbf16>, vector<32x512xf32> -> vector<32x512xf32>
    %18 = vector.extract_strided_slice %17 {offsets = [0, 0], sizes = [16, 512], strides = [1, 1]} : vector<32x512xf32> to vector<16x512xf32>
    %19 = vector.extract_strided_slice %17 {offsets = [16, 0], sizes = [16, 512], strides = [1, 1]} : vector<32x512xf32> to vector<16x512xf32>
    %20 = vector.extract_strided_slice %18 {offsets = [0, 0], sizes = [16, 256], strides = [1, 1]} : vector<16x512xf32> to vector<16x256xf32>
    %21 = vector.extract_strided_slice %18 {offsets = [0, 256], sizes = [16, 256], strides = [1, 1]} : vector<16x512xf32> to vector<16x256xf32>
    %22 = vector.extract_strided_slice %19 {offsets = [0, 0], sizes = [16, 256], strides = [1, 1]} : vector<16x512xf32> to vector<16x256xf32>
    %23 = vector.extract_strided_slice %19 {offsets = [0, 256], sizes = [16, 256], strides = [1, 1]} : vector<16x512xf32> to vector<16x256xf32>
    %24 = arith.mulf %20, %22 : vector<16x256xf32>
    %25 = arith.mulf %21, %23 : vector<16x256xf32>
    %26 = arith.addf %24, %25 : vector<16x256xf32>
    %27 = arith.mulf %21, %22 : vector<16x256xf32>
    %28 = arith.mulf %20, %23 : vector<16x256xf32>
    %29 = arith.subf %27, %28 : vector<16x256xf32>
    %30 = arith.mulf %26, %26 : vector<16x256xf32>
    %31 = arith.mulf %29, %29 : vector<16x256xf32>
    %32 = arith.addf %30, %31 : vector<16x256xf32>
    %33 = math.sqrt %32 : vector<16x256xf32>
    %cst_9 = arith.constant dense<0.000000e+00> : vector<16xf32>
    %34 = vector.multi_reduction <add>, %33, %cst_9 [1] : vector<16x256xf32> to vector<16xf32>
    %35 = vector.shape_cast %34 : vector<16xf32> to vector<16x1xf32>
    %36 = vector.extract_strided_slice %33 {offsets = [0, 0], sizes = [16, 128], strides = [1, 1]} : vector<16x256xf32> to vector<16x128xf32>
    %cst_10 = arith.constant dense<0.000000e+00> : vector<16xf32>
    %37 = vector.multi_reduction <add>, %36, %cst_10 [1] : vector<16x128xf32> to vector<16xf32>
    %38 = vector.shape_cast %37 : vector<16xf32> to vector<16x1xf32>
    %39 = vector.extract_strided_slice %26 {offsets = [0, 0], sizes = [16, 128], strides = [1, 1]} : vector<16x256xf32> to vector<16x128xf32>
    %40 = vector.extract_strided_slice %29 {offsets = [0, 0], sizes = [16, 128], strides = [1, 1]} : vector<16x256xf32> to vector<16x128xf32>
    %41 = tpu.concatenate %39, %40 in 1 : vector<16x128xf32>, vector<16x128xf32> -> vector<16x256xf32>
    %42 = arith.truncf %41 : vector<16x256xf32> to vector<16x256xbf16>
    %c0_11 = arith.constant 0 : index
    %c0_12 = arith.constant 0 : index
    %43 = vector.load %arg4[%c0_11, %c0_12] : memref<256x128xbf16, #tpu.memory_space<vmem>>, vector<256x128xbf16>
    %cst_13 = arith.constant dense<0.000000e+00> : vector<16x128xf32>
    %44 = tpu.matmul %42, %43, %cst_13 {dimension_numbers = #tpu.dot_dimension_numbers<[1], [0], [0], [1], [0, 0, 1, 1], [], []>} : vector<16x256xbf16>, vector<256x128xbf16>, vector<16x128xf32> -> vector<16x128xf32>
    %cst_14 = arith.constant dense<0xFF800000> : vector<16xf32>
    %45 = vector.multi_reduction <maximumf>, %44, %cst_14 [1] : vector<16x128xf32> to vector<16xf32>
    %46 = vector.shape_cast %45 : vector<16xf32> to vector<16x1xf32>
    %cst_15 = arith.constant 1.000000e-30 : f32
    %47 = vector.broadcast %cst_15 : f32 to vector<16x1xf32>
    %48 = arith.maximumf %38, %47 : vector<16x1xf32>
    %49 = tpu.reciprocal %48 {approx = true} : vector<16x1xf32> -> vector<16x1xf32>
    %50 = arith.mulf %46, %35 : vector<16x1xf32>
    %cst_16 = arith.constant 0.000000e+00 : f32
    %51 = vector.broadcast %cst_16 : f32 to vector<16x1xf32>
    %52 = arith.subf %51, %50 : vector<16x1xf32>
    %53 = arith.mulf %52, %49 : vector<16x1xf32>
    %c0_17 = arith.constant 0 : index
    %c0_18 = arith.constant 0 : index
    %54 = vector.load %arg5[%c0_17, %c0_18] : memref<16x1xf32, #tpu.memory_space<vmem>>, vector<16x1xf32>
    tpu.vector_store %arg5[%c0_17, %c0_18], %53 {strides = array<i32>} : memref<16x1xf32, #tpu.memory_space<vmem>>, vector<16x1xf32>,
    return
  }
  func.func @transform_0(%arg0: i32) -> (i32, i32) {
    %c0_i32 = arith.constant 0 : i32
    %c0_i32_0 = arith.constant 0 : i32
    return %arg0, %c0_i32 : i32, i32
  }
  func.func @transform_1(%arg0: i32) -> (i32, i32) {
    %c0_i32 = arith.constant 0 : i32
    %c0_i32_0 = arith.constant 0 : i32
    return %arg0, %c0_i32 : i32, i32
  }
  func.func @transform_2(%arg0: i32) -> (i32, i32) {
    %c0_i32 = arith.constant 0 : i32
    %c0_i32_0 = arith.constant 0 : i32
    %c0_i32_1 = arith.constant 0 : i32
    return %c0_i32, %c0_i32_0 : i32, i32
  }
  func.func @transform_3(%arg0: i32) -> (i32, i32) {
    %c0_i32 = arith.constant 0 : i32
    %c0_i32_0 = arith.constant 0 : i32
    %c0_i32_1 = arith.constant 0 : i32
    return %c0_i32, %c0_i32_0 : i32, i32
  }
  func.func @transform_4(%arg0: i32) -> (i32, i32) {
    %c0_i32 = arith.constant 0 : i32
    %c0_i32_0 = arith.constant 0 : i32
    return %arg0, %c0_i32 : i32, i32
  }
}

</mosaic_0001>

<llo_original>
// kernel: tpu_custom_call.1
$region0: #{tpu_custom_call.1}
  #allocation0 [shape = 'u32[]', space=smem, size = 0x4, offset = 0x4, fixed_abs, tag = 'smem constant byte address 0x4 - core index']
  #allocation1 [shape = 'u32[144,128]{1,0:T(1,128)}', space=vmem, size = 0x12000, scoped, tag = 'internal scratch']
  %s0 = inlined_call_operand.vmem [shape: f32[32,16], index: 0, kind: input, shape index: {}]
  %s1 = inlined_call_operand.vmem [shape: f32[32,16], index: 1, kind: input, shape index: {}]
  %s2 = inlined_call_operand.vmem [shape: bf16[16,512], index: 2, kind: input, shape index: {}]
  %s3 = inlined_call_operand.hbm [shape: bf16[256,128], index: 3, kind: input, shape index: {}]
  %s4 = inlined_call_operand.vmem [shape: f32[32,1], index: 4, kind: output, shape index: {}]
  %s5 = sld [smem:[#allocation0]]
  $region53: #{tpu_custom_call.1} parent=0
    _
  %s7 = ssub.s32 1, %s5
  %s8 = scalar_select 0, %s7, %s5
  $region1: #{tpu_custom_call.1} parent=0
    #allocation2 [shape = 'u8[65536]{0}', space=vmem, size = 0x10000, scoped, tag = 'input window, operand 3, single buffered']
    #allocation3 [shape = 's32[2]{0}', space=sflag, size = 0x8, scoped, tag = 'scoped memory for tpu_custom_call.1']
    %9 = vsyncpa [#allocation3], 0
    loop: start=0, step=1, limit=4
    $region2: #{tpu_custom_call.1} parent=1 // loop_pre_header
      _
    $region3: #{tpu_custom_call.1} parent=1 // loop_header
      %s11 = sphi 0, %s15
      %p12 = scmp.ge.s32.totalorder %s11, 4
      %s21 = sphi 0, %s23
      %s24 = sphi 0, %s21
      %s25 = sphi 0, %s24
      %s41 = sphi 0, %s25
      %s47 = sphi 0, %s49
      %s50 = sphi 0, %s47
      %s51 = sphi 0, %s50
      %s67 = sphi 0, %s51
      %s71 = sphi 0, %s71
      %s73 = sphi 0, %s71
      %s74 = sphi 0, %s73
      %s88 = sphi 0, %s74
      %s92 = sphi 0, %s92
      %s94 = sphi 0, %s92
      %s95 = sphi 0, %s94
      %s109 = sphi 0, %s95
      %s115 = sphi 0, %s117
      %s118 = sphi 0, %s115
      %s119 = sphi 0, %s118
      %s135 = sphi 0, %s119
    $region4: #{tpu_custom_call.1} parent=1 // loop_header_branch
      %14 = sbr.rel (%p12) target = $region8
    $region5: #{tpu_custom_call.1} parent=1 // loop_body
      %s16 = ssub.s32 %s11, 1
      %s17 = ssub.s32 %s11, 2
      %s18 = sadd.s32 %s11, 1
      %s19 = ssub.s32 %s11, %s18
      %p20 = scmp.eq.s32.totalorder %s19, 0
      %s22 = sadd.s32 %s21, 1
      %s23 = scalar_select %p20, %s21, %s22
      %p26 = pneg %p20
      %p27 = scmp.eq.s32.totalorder %s11, 1
      %p28 = por %p26, %p27
      %p29 = scmp.ne.s32.totalorder %s21, %s24
      %p30 = scmp.eq.s32.totalorder %s11, 0
      %p31 = por %p29, %p30
      %p32 = scmp.ne.s32.totalorder %s21, %s24
      %p33 = scmp.eq.s32.totalorder %s16, 1
      %p34 = por %p32, %p33
      %p35 = scmp.ne.s32.totalorder %s24, %s25
      %p36 = scmp.eq.s32.totalorder %s16, 0
      %p37 = por %p35, %p36
      %p38 = scmp.ne.s32.totalorder %s24, %s25
      %p39 = scmp.eq.s32.totalorder %s17, 1
      %p40 = por %p38, %p39
      %p42 = scmp.ne.s32.totalorder %s25, %s41
      %p43 = scmp.eq.s32.totalorder %s17, 0
      %p44 = por %p42, %p43
      %s45 = ssub.s32 %s11, %s18
      %p46 = scmp.eq.s32.totalorder %s45, 0
      %s48 = sadd.s32 %s47, 1
      %s49 = scalar_select %p46, %s47, %s48
      %p52 = pneg %p46
      %p53 = scmp.eq.s32.totalorder %s11, 1
      %p54 = por %p52, %p53
      %p55 = scmp.ne.s32.totalorder %s47, %s50
      %p56 = scmp.eq.s32.totalorder %s11, 0
      %p57 = por %p55, %p56
      %p58 = scmp.ne.s32.totalorder %s47, %s50
      %p59 = scmp.eq.s32.totalorder %s16, 1
      %p60 = por %p58, %p59
      %p61 = scmp.ne.s32.totalorder %s50, %s51
      %p62 = scmp.eq.s32.totalorder %s16, 0
      %p63 = por %p61, %p62
      %p64 = scmp.ne.s32.totalorder %s50, %s51
      %p65 = scmp.eq.s32.totalorder %s17, 1
      %p66 = por %p64, %p65
      %p68 = scmp.ne.s32.totalorder %s51, %s67
      %p69 = scmp.eq.s32.totalorder %s17, 0
      %p70 = por %p68, %p69
      %s72 = sadd.s32 %s71, 1
      %p75 = scmp.eq.s32.totalorder %s11, 1
      %p76 = scmp.ne.s32.totalorder %s71, %s73
      %p77 = scmp.eq.s32.totalorder %s11, 0
      %p78 = por %p76, %p77
      %p79 = scmp.ne.s32.totalorder %s71, %s73
      %p80 = scmp.eq.s32.totalorder %s16, 1
      %p81 = por %p79, %p80
      %p82 = scmp.ne.s32.totalorder %s73, %s74
      %p83 = scmp.eq.s32.totalorder %s16, 0
      %p84 = por %p82, %p83
      %p85 = scmp.ne.s32.totalorder %s73, %s74
      %p86 = scmp.eq.s32.totalorder %s17, 1
      %p87 = por %p85, %p86
      %p89 = scmp.ne.s32.totalorder %s74, %s88
      %p90 = scmp.eq.s32.totalorder %s17, 0
      %p91 = por %p89, %p90
      %s93 = sadd.s32 %s92, 1
      %p96 = scmp.eq.s32.totalorder %s11, 1
      %p97 = scmp.ne.s32.totalorder %s92, %s94
      %p98 = scmp.eq.s32.totalorder %s11, 0
      %p99 = por %p97, %p98
      %p100 = scmp.ne.s32.totalorder %s92, %s94
      %p101 = scmp.eq.s32.totalorder %s16, 1
      %p102 = por %p100, %p101
      %p103 = scmp.ne.s32.totalorder %s94, %s95
      %p104 = scmp.eq.s32.totalorder %s16, 0
      %p105 = por %p103, %p104
      %p106 = scmp.ne.s32.totalorder %s94, %s95
      %p107 = scmp.eq.s32.totalorder %s17, 1
      %p108 = por %p106, %p107
      %p110 = scmp.ne.s32.totalorder %s95, %s109
      %p111 = scmp.eq.s32.totalorder %s17, 0
      %p112 = por %p110, %p111
      %s113 = ssub.s32 %s11, %s18
      %p114 = scmp.eq.s32.totalorder %s113, 0
      %s116 = sadd.s32 %s115, 1
      %s117 = scalar_select %p114, %s115, %s116
      %p120 = pneg %p114
      %p121 = scmp.eq.s32.totalorder %s11, 1
      %p122 = por %p120, %p121
      %p123 = scmp.ne.s32.totalorder %s115, %s118
      %p124 = scmp.eq.s32.totalorder %s11, 0
      %p125 = por %p123, %p124
      %p126 = scmp.ne.s32.totalorder %s115, %s118
      %p127 = scmp.eq.s32.totalorder %s16, 1
      %p128 = por %p126, %p127
      %p129 = scmp.ne.s32.totalorder %s118, %s119
      %p130 = scmp.eq.s32.totalorder %s16, 0
      %p131 = por %p129, %p130
      %p132 = scmp.ne.s32.totalorder %s118, %s119
      %p133 = scmp.eq.s32.totalorder %s17, 1
      %p134 = por %p132, %p133
      %p136 = scmp.ne.s32.totalorder %s119, %s135
      %p137 = scmp.eq.s32.totalorder %s17, 0
      %p138 = por %p136, %p137
      %p139 = scmp.le.s32.totalorder 1, %s11
      %p140 = scmp.lt.s32.totalorder %s11, 3
      %p141 = pnand %p139, %p140
      %p142 = pneg %p141
      // Predicated region
      $region9: #{tpu_custom_call.1} parent=5 // pred_check
        _
      $region10: #{tpu_custom_call.1} parent=5 // pred_check_branch
        %144 = sbr.rel (%p141) target = $region12
      $region11: #{tpu_custom_call.1} parent=5 // pred_region
        %s145 = ssub.s32 %s11, 1
        // Predicated region
        $region13: #{tpu_custom_call.1} parent=11 // pred_check
          %p146 = pneg %p84
        $region14: #{tpu_custom_call.1} parent=11 // pred_check_branch
          %148 = sbr.rel (%p146) target = $region16
        $region15: #{tpu_custom_call.1} parent=11 // pred_region
          _
        $region16: #{tpu_custom_call.1} parent=11 // pred_fallthru
          _
        // Predicated region
        $region17: #{tpu_custom_call.1} parent=11 // pred_check
          %p149 = pneg %p105
        $region18: #{tpu_custom_call.1} parent=11 // pred_check_branch
          %151 = sbr.rel (%p149) target = $region20
        $region19: #{tpu_custom_call.1} parent=11 // pred_region
          %s153 = ssub.s32 2048, 2048
          %154 = vsyncadd [#allocation3], %s153
          %s155 = sshll.u32 [#allocation2], 4
          %s156 = int_to_ptr.vmem [resolvable:$true] %s155
          %161 = dma.hbm_to_vmem [thread:$0]  %s3, 2048, %s156, [#allocation3], 64, 64, 4
        $region20: #{tpu_custom_call.1} parent=11 // pred_fallthru
          _
      $region12: #{tpu_custom_call.1} parent=5 // pred_fallthru
        _
      %p162 = scmp.lt.s32.totalorder %s11, 2
      // Predicated region
      $region21: #{tpu_custom_call.1} parent=5 // pred_check
        %p163 = pneg %p162
      $region22: #{tpu_custom_call.1} parent=5 // pred_check_branch
        %165 = sbr.rel (%p163) target = $region24
      $region23: #{tpu_custom_call.1} parent=5 // pred_region
        // Predicated region
        $region25: #{tpu_custom_call.1} parent=23 // pred_check
          %p166 = pneg %p31
        $region26: #{tpu_custom_call.1} parent=23 // pred_check_branch
          %168 = sbr.rel (%p166) target = $region28
        $region27: #{tpu_custom_call.1} parent=23 // pred_region
          %s169 = smul.u32 2, %s11
          %p170 = scmp.lt.s32.totalorder %s169, 3
          %s171 = scalar_select %p170, %s169, 3
          %s172 = smul.addr %s171, 8
          %s173 = scalar_lea.vmem %s0, %s172
          %s174 = smul.u32 2, %s11
        $region28: #{tpu_custom_call.1} parent=23 // pred_fallthru
          _
        // Predicated region
        $region29: #{tpu_custom_call.1} parent=23 // pred_check
          %p175 = pneg %p57
        $region30: #{tpu_custom_call.1} parent=23 // pred_check_branch
          %177 = sbr.rel (%p175) target = $region32
        $region31: #{tpu_custom_call.1} parent=23 // pred_region
          %s178 = smul.u32 2, %s11
          %p179 = scmp.lt.s32.totalorder %s178, 3
          %s180 = scalar_select %p179, %s178, 3
          %s181 = smul.addr %s180, 8
          %s182 = scalar_lea.vmem %s1, %s181
          %s183 = smul.u32 2, %s11
        $region32: #{tpu_custom_call.1} parent=23 // pred_fallthru
          _
      $region24: #{tpu_custom_call.1} parent=5 // pred_fallthru
        _
      %p184 = scmp.le.s32.totalorder 1, %s11
      %p185 = scmp.lt.s32.totalorder %s11, 3
      %p186 = pnand %p184, %p185
      %p187 = pneg %p186
      // Predicated region
      $region33: #{tpu_custom_call.1} parent=5 // pred_check
        _
      $region34: #{tpu_custom_call.1} parent=5 // pred_check_branch
        %189 = sbr.rel (%p186) target = $region36
      $region35: #{tpu_custom_call.1} parent=5 // pred_region
        %s190 = ssub.s32 %s11, 1
        // Predicated region
        $region37: #{tpu_custom_call.1} parent=35 // pred_check
          %p191 = pneg %p105
        $region38: #{tpu_custom_call.1} parent=35 // pred_check_branch
          %193 = sbr.rel (%p191) target = $region40
        $region39: #{tpu_custom_call.1} parent=35 // pred_region
          %194 = dma.done [#allocation3], 2048
        $region40: #{tpu_custom_call.1} parent=35 // pred_fallthru
          _
        %s195 = smul.u32 2, %s16
        %p196 = scmp.lt.s32.totalorder %s195, 3
        %s197 = scalar_select %p196, %s195, 3
        %s198 = smul.addr %s197, 8
        %s199 = scalar_lea.vmem %s0, %s198
        %p200 = pneg %p37
        %p201 = pneg %p34
        %s202 = smul.u32 2, %s16
        %p203 = scmp.lt.s32.totalorder %s202, 3
        %s204 = scalar_select %p203, %s202, 3
        %s205 = smul.addr %s204, 8
        %s206 = scalar_lea.vmem %s1, %s205
        %p207 = pneg %p63
        %p208 = pneg %p60
        %p209 = pneg %p84
        %p210 = pneg %p81
        %p211 = pneg %p105
        %p212 = pneg %p102
        %p213 = pneg %p131
        %p214 = pneg %p128
        %s215 = smul.u32 2, %s16
        %p216 = scmp.lt.s32.totalorder %s215, 3
        %s217 = scalar_select %p216, %s215, 3
        %s218 = smul.addr %s217, 8
        %s219 = scalar_lea.vmem %s4, %s218
        %s220 = smul.u32 2, %s16
        %p221 = scmp.lt.s32.totalorder %s220, 3
        %s222 = scalar_select %p221, %s220, 3
        %s223 = smul.addr %s222, 8
        %s224 = scalar_lea.vmem %s0, %s223
        %s225 = smul.u32 2, %s16
        %s226 = smul.u32 2, %s16
        %p227 = scmp.lt.s32.totalorder %s226, 3
        %s228 = scalar_select %p227, %s226, 3
        %s229 = smul.addr %s228, 8
        %s230 = scalar_lea.vmem %s1, %s229
        %s231 = smul.u32 2, %s16
        %s232 = smul.u32 2, %s16
        %p233 = scmp.lt.s32.totalorder %s232, 3
        %s234 = scalar_select %p233, %s232, 3
        %s235 = smul.addr %s234, 8
        %s236 = scalar_lea.vmem %s4, %s235
        %s237 = smul.u32 2, %s16
        %v239 = vld [vmem:[%s224] sm:$0xff]
        %v240 = vld [vmem:[%s224 + $0x8] sm:$0xff]
        %v241 = vld [vmem:[%s230] sm:$0xff]
        %v242 = vld [vmem:[%s230 + $0x8] sm:$0xff]
        %vm243 = vcmask 130048
        %v244 = vsel %vm243, %v239, 0.0
        %245 = vadd.xlane.f32.xlu0 %v244
        %v246 = vpop.xlane.xlu0 %245
        %v247 = vsel %vm243, %v240, 0.0
        %248 = vadd.xlane.f32.xlu0 %v247
        %v249 = vpop.xlane.xlu0 %248
        %v250 = vrcp.pop 16.0
        %v251 = vmul.f32 %v246, %v250
        %v252 = vmul.f32 %v249, %v250
        %v253 = vsub.f32 %v239, %v251
        %v254 = vsub.f32 %v240, %v252
        %v255 = vsel %vm243, %v241, 0.0
        %256 = vadd.xlane.f32.xlu0 %v255
        %v257 = vpop.xlane.xlu0 %256
        %v258 = vsel %vm243, %v242, 0.0
        %259 = vadd.xlane.f32.xlu0 %v258
        %v260 = vpop.xlane.xlu0 %259
        %v261 = vmul.f32 %v257, %v250
        %v262 = vmul.f32 %v260, %v250
        %v263 = vsub.f32 %v241, %v261
        %v264 = vsub.f32 %v242, %v262
        %v265 = vpack.c.bf16 %v254, %v253
        %v266 = vpack.c.bf16 %v264, %v263
        %v267 = vld [vmem:[%s2] sm:$0xff]
        %v268 = vld [vmem:[%s2 + $0x8] sm:$0xff]
        %v269 = vld [vmem:[%s2 + $0x10] sm:$0xff]
        %v270 = vld [vmem:[%s2 + $0x18] sm:$0xff]
        %v275 = vunpack.c.l.b16 %v267
        %v276 = vunpack.c.h.b16 %v267
        %v277 = vunpack.c.l.b16 %v268
        %v278 = vunpack.c.h.b16 %v268
        %v279 = vunpack.c.l.b16 %v269
        %v280 = vunpack.c.h.b16 %v269
        %v281 = vunpack.c.l.b16 %v270
        %v282 = vunpack.c.h.b16 %v270
        %v283 = vpack.c.b16 %v279, %v275
        %v284 = vpack.c.b16 %v280, %v276
        %v285 = vpack.c.b16 %v281, %v277
        %v286 = vpack.c.b16 %v282, %v278
        %v292 = vsel %vm243, %v265, 0
        %v295 = vsel %vm243, %v266, 0
        %297 = vmatprep.subr.bf16.mxu0 %v284
        %298 = vmatpush1.bf16.msra.mxu0 %v283
        %299 = vmatprep.subr.bf16.mxu0 0
        %300 = vmatpush1.bf16.msra.mxu0 0
        %301 = vmatprep.subr.bf16.mxu0 0
        %302 = vmatpush1.bf16.msra.mxu0 0
        %303 = vmatprep.subr.bf16.mxu0 0
        %304 = vmatpush1.bf16.msra.mxu0 0
        %305 = vmatprep.subr.bf16.mxu0 0
        %306 = vmatpush1.bf16.msra.mxu0 0
        %307 = vmatprep.subr.bf16.mxu0 0
        %308 = vmatpush1.bf16.msra.mxu0 0
        %309 = vmatprep.subr.bf16.mxu0 0
        %310 = vmatpush1.bf16.msra.mxu0 0
        %311 = vmatprep.subr.bf16.mxu0 0
        %312 = vmatpush1.bf16.msra.mxu0 0
        %313 = vmatprep.subr.bf16.mxu0 0
        %314 = vmatpush1.bf16.msra.mxu0 0
        %315 = vmatprep.subr.bf16.mxu0 0
        %316 = vmatpush1.bf16.msra.mxu0 0
        %317 = vmatprep.subr.bf16.mxu0 0
        %318 = vmatpush1.bf16.msra.mxu0 0
        %319 = vmatprep.subr.bf16.mxu0 0
        %320 = vmatpush1.bf16.msra.mxu0 0
        %321 = vmatprep.subr.bf16.mxu0 0
        %322 = vmatpush1.bf16.msra.mxu0 0
        %323 = vmatprep.subr.bf16.mxu0 0
        %324 = vmatpush1.bf16.msra.mxu0 0
        %325 = vmatprep.subr.bf16.mxu0 0
        %326 = vmatpush1.bf16.msra.mxu0 0
        %327 = vmatprep.subr.bf16.mxu0 0
        %328 = vmatpush1.bf16.msra.mxu0 0
        %329 = vmatprep.mubr.bf16.mxu0 0
        %330 = vmatmul.mubr.bf16.gmra.mrb[0].mxu0 %v292
        %v331 = vpop.f32.mrb[0].mxu0
        %v332 = vadd.f32 0.0, %v331
        %v333 = vpop.f32.mrb[0].mxu0
        %v334 = vadd.f32 0.0, %v333
        %v335 = vpop.f32.mrb[0].mxu0
        %v336 = vadd.f32 0.0, %v335
        %v337 = vpop.f32.mrb[0].mxu0
        %v338 = vadd.f32 0.0, %v337
        %339 = vmatprep.mubr.bf16.mxu0 0
        %340 = vmatmul.mubr.bf16.gmra.mrb[0].mxu0 %v295
        %v341 = vpop.f32.mrb[0].mxu0
        %v342 = vadd.f32 0.0, %v341
        %v343 = vpop.f32.mrb[0].mxu0
        %v344 = vadd.f32 0.0, %v343
        %v345 = vpop.f32.mrb[0].mxu0
        %v346 = vadd.f32 0.0, %v345
        %v347 = vpop.f32.mrb[0].mxu0
        %v348 = vadd.f32 0.0, %v347
        %349 = vdwg.mxu0
        %350 = vmatprep.subr.bf16.mxu0 %v286
        %351 = vmatpush1.bf16.msra.mxu0 %v285
        %352 = vmatprep.subr.bf16.mxu0 0
        %353 = vmatpush1.bf16.msra.mxu0 0
        %354 = vmatprep.subr.bf16.mxu0 0
        %355 = vmatpush1.bf16.msra.mxu0 0
        %356 = vmatprep.subr.bf16.mxu0 0
        %357 = vmatpush1.bf16.msra.mxu0 0
        %358 = vmatprep.subr.bf16.mxu0 0
        %359 = vmatpush1.bf16.msra.mxu0 0
        %360 = vmatprep.subr.bf16.mxu0 0
        %361 = vmatpush1.bf16.msra.mxu0 0
        %362 = vmatprep.subr.bf16.mxu0 0
        %363 = vmatpush1.bf16.msra.mxu0 0
        %364 = vmatprep.subr.bf16.mxu0 0
        %365 = vmatpush1.bf16.msra.mxu0 0
        %366 = vmatprep.subr.bf16.mxu0 0
        %367 = vmatpush1.bf16.msra.mxu0 0
        %368 = vmatprep.subr.bf16.mxu0 0
        %369 = vmatpush1.bf16.msra.mxu0 0
        %370 = vmatprep.subr.bf16.mxu0 0
        %371 = vmatpush1.bf16.msra.mxu0 0
        %372 = vmatprep.subr.bf16.mxu0 0
        %373 = vmatpush1.bf16.msra.mxu0 0
        %374 = vmatprep.subr.bf16.mxu0 0
        %375 = vmatpush1.bf16.msra.mxu0 0
        %376 = vmatprep.subr.bf16.mxu0 0
        %377 = vmatpush1.bf16.msra.mxu0 0
        %378 = vmatprep.subr.bf16.mxu0 0
        %379 = vmatpush1.bf16.msra.mxu0 0
        %380 = vmatprep.subr.bf16.mxu0 0
        %381 = vmatpush1.bf16.msra.mxu0 0
        %382 = vmatprep.mubr.bf16.mxu0 0
        %383 = vmatmul.mubr.bf16.gmra.mrb[0].mxu0 %v292
        %v384 = vpop.f32.mrb[0].mxu0
        %v385 = vadd.f32 0.0, %v384
        %v386 = vpop.f32.mrb[0].mxu0
        %v387 = vadd.f32 0.0, %v386
        %v388 = vpop.f32.mrb[0].mxu0
        %v389 = vadd.f32 0.0, %v388
        %v390 = vpop.f32.mrb[0].mxu0
        %v391 = vadd.f32 0.0, %v390
        %392 = vmatprep.mubr.bf16.mxu0 0
        %393 = vmatmul.mubr.bf16.gmra.mrb[0].mxu0 %v295
        %v394 = vpop.f32.mrb[0].mxu0
        %v395 = vadd.f32 0.0, %v394
        %v396 = vpop.f32.mrb[0].mxu0
        %v397 = vadd.f32 0.0, %v396
        %v398 = vpop.f32.mrb[0].mxu0
        %v399 = vadd.f32 0.0, %v398
        %v400 = vpop.f32.mrb[0].mxu0
        %v401 = vadd.f32 0.0, %v400
        %402 = vdwg.mxu0
        %v403 = vmul.f32 %v332, %v342
        %v404 = vmul.f32 %v334, %v344
        %v405 = vmul.f32 %v336, %v346
        %v406 = vmul.f32 %v338, %v348
        %v407 = vmul.f32 %v385, %v395
        %v408 = vmul.f32 %v387, %v397
        %v409 = vmul.f32 %v389, %v399
        %v410 = vmul.f32 %v391, %v401
        %v411 = vadd.f32 %v403, %v407
        %v412 = vadd.f32 %v404, %v408
        %v413 = vadd.f32 %v405, %v409
        %v414 = vadd.f32 %v406, %v410
        %v415 = vmul.f32 %v385, %v342
        %v416 = vmul.f32 %v387, %v344
        %v417 = vmul.f32 %v389, %v346
        %v418 = vmul.f32 %v391, %v348
        %v419 = vmul.f32 %v332, %v395
        %v420 = vmul.f32 %v334, %v397
        %v421 = vmul.f32 %v336, %v399
        %v422 = vmul.f32 %v338, %v401
        %v423 = vsub.f32 %v415, %v419
        %v424 = vsub.f32 %v416, %v420
        %v425 = vsub.f32 %v417, %v421
        %v426 = vsub.f32 %v418, %v422
        %v427 = vmul.f32 %v411, %v411
        %v428 = vmul.f32 %v412, %v412
        %v429 = vmul.f32 %v413, %v413
        %v430 = vmul.f32 %v414, %v414
        %v431 = vmul.f32 %v423, %v423
        %v432 = vmul.f32 %v424, %v424
        %v433 = vmul.f32 %v425, %v425
        %v434 = vmul.f32 %v426, %v426
        %v435 = vadd.f32 %v427, %v431
        %v436 = vadd.f32 %v428, %v432
        %v437 = vadd.f32 %v429, %v433
        %v438 = vadd.f32 %v430, %v434
        %v439 = vrsqrt.pop %v435
        %v440 = vmul.f32 %v435, %v439
        %vm441 = vcmp.eq.f32.partialorder %v435, inf
        %v442 = vsel %vm441, %v435, %v440
        %vm443 = vcmp.eq.f32.partialorder %v435, 0.0
        %v444 = vand.u32 %v435, 2147483648
        %v445 = vsel %vm443, %v444, %v442
        %v446 = vrsqrt.pop %v436
        %v447 = vmul.f32 %v436, %v446
        %vm448 = vcmp.eq.f32.partialorder %v436, inf
        %v449 = vsel %vm448, %v436, %v447
        %vm450 = vcmp.eq.f32.partialorder %v436, 0.0
        %v451 = vand.u32 %v436, 2147483648
        %v452 = vsel %vm450, %v451, %v449
        %v453 = vrsqrt.pop %v437
        %v454 = vmul.f32 %v437, %v453
        %vm455 = vcmp.eq.f32.partialorder %v437, inf
        %v456 = vsel %vm455, %v437, %v454
        %vm457 = vcmp.eq.f32.partialorder %v437, 0.0
        %v458 = vand.u32 %v437, 2147483648
        %v459 = vsel %vm457, %v458, %v456
        %v460 = vrsqrt.pop %v438
        %v461 = vmul.f32 %v438, %v460
        %vm462 = vcmp.eq.f32.partialorder %v438, inf
        %v463 = vsel %vm462, %v438, %v461
        %vm464 = vcmp.eq.f32.partialorder %v438, 0.0
        %v465 = vand.u32 %v438, 2147483648
        %v466 = vsel %vm464, %v465, %v463
        %v467 = vadd.f32 %v445, %v452
        %468 = vadd.xlane.f32.xlu0 %v467
        %v469 = vpop.xlane.xlu0 %468
        %v470 = vadd.f32 %v459, %v466
        %471 = vadd.xlane.f32.xlu0 %v470
        %v472 = vpop.xlane.xlu0 %471
        %473 = vadd.xlane.f32.xlu0 %v445
        %v474 = vpop.xlane.xlu0 %473
        %475 = vadd.xlane.f32.xlu0 %v459
        %v476 = vpop.xlane.xlu0 %475
        %v477 = vpack.c.bf16 %v413, %v411
        %v478 = vpack.c.bf16 %v425, %v423
        %v479 = vld [vmem:[#allocation2] sm:$0xf]
        %v480 = vld [vmem:[#allocation2 + $0x4] sm:$0xf]
        %v481 = vld [vmem:[#allocation2 + $0x8] sm:$0xf]
        %v482 = vld [vmem:[#allocation2 + $0xc] sm:$0xf]
        %v483 = vld [vmem:[#allocation2 + $0x10] sm:$0xf]
        %v484 = vld [vmem:[#allocation2 + $0x14] sm:$0xf]
        %v485 = vld [vmem:[#allocation2 + $0x18] sm:$0xf]
        %v486 = vld [vmem:[#allocation2 + $0x1c] sm:$0xf]
        %v487 = vld [vmem:[#allocation2 + $0x20] sm:$0xf]
        %v488 = vld [vmem:[#allocation2 + $0x24] sm:$0xf]
        %v489 = vld [vmem:[#allocation2 + $0x28] sm:$0xf]
        %v490 = vld [vmem:[#allocation2 + $0x2c] sm:$0xf]
        %v491 = vld [vmem:[#allocation2 + $0x30] sm:$0xf]
        %v492 = vld [vmem:[#allocation2 + $0x34] sm:$0xf]
        %v493 = vld [vmem:[#allocation2 + $0x38] sm:$0xf]
        %v494 = vld [vmem:[#allocation2 + $0x3c] sm:$0xf]
        %v495 = vld [vmem:[#allocation2 + $0x40] sm:$0xf]
        %v496 = vld [vmem:[#allocation2 + $0x44] sm:$0xf]
        %v497 = vld [vmem:[#allocation2 + $0x48] sm:$0xf]
        %v498 = vld [vmem:[#allocation2 + $0x4c] sm:$0xf]
        %v499 = vld [vmem:[#allocation2 + $0x50] sm:$0xf]
        %v500 = vld [vmem:[#allocation2 + $0x54] sm:$0xf]
        %v501 = vld [vmem:[#allocation2 + $0x58] sm:$0xf]
        %v502 = vld [vmem:[#allocation2 + $0x5c] sm:$0xf]
        %v503 = vld [vmem:[#allocation2 + $0x60] sm:$0xf]
        %v504 = vld [vmem:[#allocation2 + $0x64] sm:$0xf]
        %v505 = vld [vmem:[#allocation2 + $0x68] sm:$0xf]
        %v506 = vld [vmem:[#allocation2 + $0x6c] sm:$0xf]
        %v507 = vld [vmem:[#allocation2 + $0x70] sm:$0xf]
        %v508 = vld [vmem:[#allocation2 + $0x74] sm:$0xf]
        %v509 = vld [vmem:[#allocation2 + $0x78] sm:$0xf]
        %v510 = vld [vmem:[#allocation2 + $0x7c] sm:$0xf]
        %v543 = vunpack.c.l.b16 %v479
        %v544 = vunpack.c.l.b16 %v480
        %v545 = vunpack.c.l.b16 %v481
        %v546 = vunpack.c.l.b16 %v482
        %v547 = vunpack.c.l.b16 %v483
        %v548 = vunpack.c.l.b16 %v484
        %v549 = vunpack.c.l.b16 %v485
        %v550 = vunpack.c.l.b16 %v486
        %v551 = vunpack.c.l.b16 %v487
        %v552 = vunpack.c.l.b16 %v488
        %v553 = vunpack.c.l.b16 %v489
        %v554 = vunpack.c.l.b16 %v490
        %v555 = vunpack.c.l.b16 %v491
        %v556 = vunpack.c.l.b16 %v492
        %v557 = vunpack.c.l.b16 %v493
        %v558 = vunpack.c.l.b16 %v494
        %v559 = vunpack.c.l.b16 %v495
        %v560 = vunpack.c.l.b16 %v496
        %v561 = vunpack.c.l.b16 %v497
        %v562 = vunpack.c.l.b16 %v498
        %v563 = vunpack.c.l.b16 %v499
        %v564 = vunpack.c.l.b16 %v500
        %v565 = vunpack.c.l.b16 %v501
        %v566 = vunpack.c.l.b16 %v502
        %v567 = vunpack.c.l.b16 %v503
        %v568 = vunpack.c.l.b16 %v504
        %v569 = vunpack.c.l.b16 %v505
        %v570 = vunpack.c.l.b16 %v506
        %v571 = vunpack.c.l.b16 %v507
        %v572 = vunpack.c.l.b16 %v508
        %v573 = vunpack.c.l.b16 %v509
        %v574 = vunpack.c.l.b16 %v510
        %v575 = vpack.c.b16 %v544, %v543
        %v576 = vpack.c.b16 %v546, %v545
        %v577 = vpack.c.b16 %v548, %v547
        %v578 = vpack.c.b16 %v550, %v549
        %v579 = vpack.c.b16 %v552, %v551
        %v580 = vpack.c.b16 %v554, %v553
        %v581 = vpack.c.b16 %v556, %v555
        %v582 = vpack.c.b16 %v558, %v557
        %v583 = vpack.c.b16 %v560, %v559
        %v584 = vpack.c.b16 %v562, %v561
        %v585 = vpack.c.b16 %v564, %v563
        %v586 = vpack.c.b16 %v566, %v565
        %v587 = vpack.c.b16 %v568, %v567
        %v588 = vpack.c.b16 %v570, %v569
        %v589 = vpack.c.b16 %v572, %v571
        %v590 = vpack.c.b16 %v574, %v573
        %607 = vmatprep.subr.bf16.mxu0 0
        %608 = vmatpush1.bf16.msra.mxu0 %v575
        %609 = vmatprep.subr.bf16.mxu0 0
        %610 = vmatpush1.bf16.msra.mxu0 %v576
        %611 = vmatprep.subr.bf16.mxu0 0
        %612 = vmatpush1.bf16.msra.mxu0 %v577
        %613 = vmatprep.subr.bf16.mxu0 0
        %614 = vmatpush1.bf16.msra.mxu0 %v578
        %615 = vmatprep.subr.bf16.mxu0 0
        %616 = vmatpush1.bf16.msra.mxu0 %v579
        %617 = vmatprep.subr.bf16.mxu0 0
        %618 = vmatpush1.bf16.msra.mxu0 %v580
        %619 = vmatprep.subr.bf16.mxu0 0
        %620 = vmatpush1.bf16.msra.mxu0 %v581
        %621 = vmatprep.subr.bf16.mxu0 0
        %622 = vmatpush1.bf16.msra.mxu0 %v582
        %623 = vmatprep.subr.bf16.mxu0 0
        %624 = vmatpush1.bf16.msra.mxu0 %v583
        %625 = vmatprep.subr.bf16.mxu0 0
        %626 = vmatpush1.bf16.msra.mxu0 %v584
        %627 = vmatprep.subr.bf16.mxu0 0
        %628 = vmatpush1.bf16.msra.mxu0 %v585
        %629 = vmatprep.subr.bf16.mxu0 0
        %630 = vmatpush1.bf16.msra.mxu0 %v586
        %631 = vmatprep.subr.bf16.mxu0 0
        %632 = vmatpush1.bf16.msra.mxu0 %v587
        %633 = vmatprep.subr.bf16.mxu0 0
        %634 = vmatpush1.bf16.msra.mxu0 %v588
        %635 = vmatprep.subr.bf16.mxu0 0
        %636 = vmatpush1.bf16.msra.mxu0 %v589
        %637 = vmatprep.subr.bf16.mxu0 0
        %638 = vmatpush1.bf16.msra.mxu0 %v590
        %639 = vmatprep.mubr.bf16.mxu0 %v478
        %640 = vmatmul.mubr.bf16.gmra.mrb[0].mxu0 %v477
        %v641 = vpop.f32.mrb[0].mxu0
        %v642 = vadd.f32 0.0, %v641
        %v643 = vpop.f32.mrb[0].mxu0
        %v644 = vpop.f32.mrb[0].mxu0
        %v645 = vadd.f32 0.0, %v644
        %v646 = vpop.f32.mrb[0].mxu0
        %647 = vdwg.mxu0
        %648 = vmax.xlane.f32.xlu0 %v642
        %v649 = vpop.xlane.xlu0 %648
        %650 = vmax.xlane.f32.xlu0 %v645
        %v651 = vpop.xlane.xlu0 %650
        %v652 = vmax.f32 %v474, 1e-30
        %v653 = vmax.f32 %v476, 1e-30
        %v654 = vrcp.pop %v652
        %v655 = vrcp.pop %v653
        %v656 = vmul.f32 %v649, %v469
        %v657 = vmul.f32 %v651, %v472
        %v658 = vsub.f32 0.0, %v656
        %v659 = vsub.f32 0.0, %v657
        %v660 = vmul.f32 %v658, %v654
        %v661 = vmul.f32 %v659, %v655
        %vm662 = vcmask 7168
        %663 = vst.msk [vmem:[%s236] sm:$0xff] %vm662, %v660
        %664 = vst.msk [vmem:[%s236 + $0x8] sm:$0xff] %vm662, %v661
        %s665 = smul.u32 2, %s16
        %p666 = scmp.lt.s32.totalorder %s665, 3
        %s667 = scalar_select %p666, %s665, 3
        %s668 = smul.addr %s667, 8
        %s669 = scalar_lea.vmem %s4, %s668
        // Predicated region
        $region41: #{tpu_custom_call.1} parent=35 // pred_check
          %p670 = pneg %p128
        $region42: #{tpu_custom_call.1} parent=35 // pred_check_branch
          %672 = sbr.rel (%p670) target = $region44
        $region43: #{tpu_custom_call.1} parent=35 // pred_region
          %s673 = smul.u32 2, %s16
        $region44: #{tpu_custom_call.1} parent=35 // pred_fallthru
          _
      $region36: #{tpu_custom_call.1} parent=5 // pred_fallthru
        _
      %p674 = scmp.le.s32.totalorder 2, %s11
      // Predicated region
      $region45: #{tpu_custom_call.1} parent=5 // pred_check
        %p675 = pneg %p674
      $region46: #{tpu_custom_call.1} parent=5 // pred_check_branch
        %677 = sbr.rel (%p675) target = $region48
      $region47: #{tpu_custom_call.1} parent=5 // pred_region
        %s678 = ssub.s32 %s11, 2
        // Predicated region
        $region49: #{tpu_custom_call.1} parent=47 // pred_check
          %p679 = pneg %p134
        $region50: #{tpu_custom_call.1} parent=47 // pred_check_branch
          %681 = sbr.rel (%p679) target = $region52
        $region51: #{tpu_custom_call.1} parent=47 // pred_region
          %s682 = smul.u32 2, %s17
          %p683 = scmp.lt.s32.totalorder %s682, 3
          %s684 = scalar_select %p683, %s682, 3
          %s685 = smul.addr %s684, 8
          %s686 = scalar_lea.vmem %s4, %s685
        $region52: #{tpu_custom_call.1} parent=47 // pred_fallthru
          _
      $region48: #{tpu_custom_call.1} parent=5 // pred_fallthru
        _
    $region6: #{tpu_custom_call.1} parent=1 // loop_footer
      %s15 = sadd.s32 1, %s11
    $region7: #{tpu_custom_call.1} parent=1 // loop_footer_branch
      %10 = sbr.rel target = $region3
    $region8: #{tpu_custom_call.1} parent=1 // loop_exit
      _
    %687 = vsyncpa [#allocation3], 1
    %s688 = scalar_lea.sflag [#allocation3], 1
    %689 = vsyncpa %s688, 1

// kernel: tpu_custom_call.1
$region0: #{tpu_custom_call.1}
  #allocation0 [shape = 'u32[]', space=smem, size = 0x4, offset = 0x4, fixed_abs, tag = 'smem constant byte address 0x4 - core index']
  #allocation1 [shape = 'u32[144,128]{1,0:T(1,128)}', space=vmem, size = 0x12000, scoped, tag = 'internal scratch']
  %s0 = inlined_call_operand.vmem [shape: f32[32,16], index: 0, kind: input, shape index: {}]
  %s1 = inlined_call_operand.vmem [shape: f32[32,16], index: 1, kind: input, shape index: {}]
  %s2 = inlined_call_operand.vmem [shape: bf16[16,512], index: 2, kind: input, shape index: {}]
  %s3 = inlined_call_operand.hbm [shape: bf16[256,128], index: 3, kind: input, shape index: {}]
  %s4 = inlined_call_operand.vmem [shape: f32[32,1], index: 4, kind: output, shape index: {}]
  %s5 = sld [smem:[#allocation0]]
  $region53: #{tpu_custom_call.1} parent=0
    _
  %s7 = ssub.s32 1, %s5
  %s8 = scalar_select 0, %s7, %s5
  $region1: #{tpu_custom_call.1} parent=0
    #allocation2 [shape = 'u8[65536]{0}', space=vmem, size = 0x10000, scoped, tag = 'input window, operand 3, single buffered']
    #allocation3 [shape = 's32[2]{0}', space=sflag, size = 0x8, scoped, tag = 'scoped memory for tpu_custom_call.1']
    %9 = vsyncpa [#allocation3], 0
    loop: start=0, step=1, limit=4
    $region2: #{tpu_custom_call.1} parent=1 // loop_pre_header
      _
    $region3: #{tpu_custom_call.1} parent=1 // loop_header
      %s11 = sphi 0, %s15
      %p12 = scmp.ge.s32.totalorder %s11, 4
      %s21 = sphi 0, %s23
      %s24 = sphi 0, %s21
      %s25 = sphi 0, %s24
      %s41 = sphi 0, %s25
      %s47 = sphi 0, %s49
      %s50 = sphi 0, %s47
      %s51 = sphi 0, %s50
      %s67 = sphi 0, %s51
      %s71 = sphi 0, %s71
      %s73 = sphi 0, %s71
      %s74 = sphi 0, %s73
      %s88 = sphi 0, %s74
      %s92 = sphi 0, %s92
      %s94 = sphi 0, %s92
      %s95 = sphi 0, %s94
      %s109 = sphi 0, %s95
      %s115 = sphi 0, %s117
      %s118 = sphi 0, %s115
      %s119 = sphi 0, %s118
      %s135 = sphi 0, %s119
    $region4: #{tpu_custom_call.1} parent=1 // loop_header_branch
      %14 = sbr.rel (%p12) target = $region8
    $region5: #{tpu_custom_call.1} parent=1 // loop_body
      %s16 = ssub.s32 %s11, 1
      %s17 = ssub.s32 %s11, 2
      %s18 = sadd.s32 %s11, 1
      %s19 = ssub.s32 %s11, %s18
      %p20 = scmp.eq.s32.totalorder %s19, 0
      %s22 = sadd.s32 %s21, 1
      %s23 = scalar_select %p20, %s21, %s22
      %p26 = pneg %p20
      %p27 = scmp.eq.s32.totalorder %s11, 1
      %p28 = por %p26, %p27
      %p29 = scmp.ne.s32.totalorder %s21, %s24
      %p30 = scmp.eq.s32.totalorder %s11, 0
      %p31 = por %p29, %p30
      %p32 = scmp.ne.s32.totalorder %s21, %s24
      %p33 = scmp.eq.s32.totalorder %s16, 1
      %p34 = por %p32, %p33
      %p35 = scmp.ne.s32.totalorder %s24, %s25
      %p36 = scmp.eq.s32.totalorder %s16, 0
      %p37 = por %p35, %p36
      %p38 = scmp.ne.s32.totalorder %s24, %s25
      %p39 = scmp.eq.s32.totalorder %s17, 1
      %p40 = por %p38, %p39
      %p42 = scmp.ne.s32.totalorder %s25, %s41
      %p43 = scmp.eq.s32.totalorder %s17, 0
      %p44 = por %p42, %p43
      %s45 = ssub.s32 %s11, %s18
      %p46 = scmp.eq.s32.totalorder %s45, 0
      %s48 = sadd.s32 %s47, 1
      %s49 = scalar_select %p46, %s47, %s48
      %p52 = pneg %p46
      %p53 = scmp.eq.s32.totalorder %s11, 1
      %p54 = por %p52, %p53
      %p55 = scmp.ne.s32.totalorder %s47, %s50
      %p56 = scmp.eq.s32.totalorder %s11, 0
      %p57 = por %p55, %p56
      %p58 = scmp.ne.s32.totalorder %s47, %s50
      %p59 = scmp.eq.s32.totalorder %s16, 1
      %p60 = por %p58, %p59
      %p61 = scmp.ne.s32.totalorder %s50, %s51
      %p62 = scmp.eq.s32.totalorder %s16, 0
      %p63 = por %p61, %p62
      %p64 = scmp.ne.s32.totalorder %s50, %s51
      %p65 = scmp.eq.s32.totalorder %s17, 1
      %p66 = por %p64, %p65
      %p68 = scmp.ne.s32.totalorder %s51, %s67
      %p69 = scmp.eq.s32.totalorder %s17, 0
      %p70 = por %p68, %p69
      %s72 = sadd.s32 %s71, 1
      %p75 = scmp.eq.s32.totalorder %s11, 1
      %p76 = scmp.ne.s32.totalorder %s71, %s73
      %p77 = scmp.eq.s32.totalorder %s11, 0
      %p78 = por %p76, %p77
      %p79 = scmp.ne.s32.totalorder %s71, %s73
      %p80 = scmp.eq.s32.totalorder %s16, 1
      %p81 = por %p79, %p80
      %p82 = scmp.ne.s32.totalorder %s73, %s74
      %p83 = scmp.eq.s32.totalorder %s16, 0
      %p84 = por %p82, %p83
      %p85 = scmp.ne.s32.totalorder %s73, %s74
      %p86 = scmp.eq.s32.totalorder %s17, 1
      %p87 = por %p85, %p86
      %p89 = scmp.ne.s32.totalorder %s74, %s88
      %p90 = scmp.eq.s32.totalorder %s17, 0
      %p91 = por %p89, %p90
      %s93 = sadd.s32 %s92, 1
      %p96 = scmp.eq.s32.totalorder %s11, 1
      %p97 = scmp.ne.s32.totalorder %s92, %s94
      %p98 = scmp.eq.s32.totalorder %s11, 0
      %p99 = por %p97, %p98
      %p100 = scmp.ne.s32.totalorder %s92, %s94
      %p101 = scmp.eq.s32.totalorder %s16, 1
      %p102 = por %p100, %p101
      %p103 = scmp.ne.s32.totalorder %s94, %s95
      %p104 = scmp.eq.s32.totalorder %s16, 0
      %p105 = por %p103, %p104
      %p106 = scmp.ne.s32.totalorder %s94, %s95
      %p107 = scmp.eq.s32.totalorder %s17, 1
      %p108 = por %p106, %p107
      %p110 = scmp.ne.s32.totalorder %s95, %s109
      %p111 = scmp.eq.s32.totalorder %s17, 0
      %p112 = por %p110, %p111
      %s113 = ssub.s32 %s11, %s18
      %p114 = scmp.eq.s32.totalorder %s113, 0
      %s116 = sadd.s32 %s115, 1
      %s117 = scalar_select %p114, %s115, %s116
      %p120 = pneg %p114
      %p121 = scmp.eq.s32.totalorder %s11, 1
      %p122 = por %p120, %p121
      %p123 = scmp.ne.s32.totalorder %s115, %s118
      %p124 = scmp.eq.s32.totalorder %s11, 0
      %p125 = por %p123, %p124
      %p126 = scmp.ne.s32.totalorder %s115, %s118
      %p127 = scmp.eq.s32.totalorder %s16, 1
      %p128 = por %p126, %p127
      %p129 = scmp.ne.s32.totalorder %s118, %s119
      %p130 = scmp.eq.s32.totalorder %s16, 0
      %p131 = por %p129, %p130
      %p132 = scmp.ne.s32.totalorder %s118, %s119
      %p133 = scmp.eq.s32.totalorder %s17, 1
      %p134 = por %p132, %p133
      %p136 = scmp.ne.s32.totalorder %s119, %s135
      %p137 = scmp.eq.s32.totalorder %s17, 0
      %p138 = por %p136, %p137
      %p139 = scmp.le.s32.totalorder 1, %s11
      %p140 = scmp.lt.s32.totalorder %s11, 3
      %p141 = pnand %p139, %p140
      %p142 = pneg %p141
      // Predicated region
      $region9: #{tpu_custom_call.1} parent=5 // pred_check
        _
      $region10: #{tpu_custom_call.1} parent=5 // pred_check_branch
        %144 = sbr.rel (%p141) target = $region12
      $region11: #{tpu_custom_call.1} parent=5 // pred_region
        %s145 = ssub.s32 %s11, 1
        // Predicated region
        $region13: #{tpu_custom_call.1} parent=11 // pred_check
          %p146 = pneg %p84
        $region14: #{tpu_custom_call.1} parent=11 // pred_check_branch
          %148 = sbr.rel (%p146) target = $region16
        $region15: #{tpu_custom_call.1} parent=11 // pred_region
          _
        $region16: #{tpu_custom_call.1} parent=11 // pred_fallthru
          _
        // Predicated region
        $region17: #{tpu_custom_call.1} parent=11 // pred_check
          %p149 = pneg %p105
        $region18: #{tpu_custom_call.1} parent=11 // pred_check_branch
          %151 = sbr.rel (%p149) target = $region20
        $region19: #{tpu_custom_call.1} parent=11 // pred_region
          %s153 = ssub.s32 2048, 2048
          %154 = vsyncadd [#allocation3], %s153
          %s155 = sshll.u32 [#allocation2], 4
          %s156 = int_to_ptr.vmem [resolvable:$true] %s155
          %161 = dma.hbm_to_vmem [thread:$0]  %s3, 2048, %s156, [#allocation3], 64, 64, 4
        $region20: #{tpu_custom_call.1} parent=11 // pred_fallthru
          _
      $region12: #{tpu_custom_call.1} parent=5 // pred_fallthru
        _
      %p162 = scmp.lt.s32.totalorder %s11, 2
      // Predicated region
      $region21: #{tpu_custom_call.1} parent=5 // pred_check
        %p163 = pneg %p162
      $region22: #{tpu_custom_call.1} parent=5 // pred_check_branch
        %165 = sbr.rel (%p163) target = $region24
      $region23: #{tpu_custom_call.1} parent=5 // pred_region
        // Predicated region
        $region25: #{tpu_custom_call.1} parent=23 // pred_check
          %p166 = pneg %p31
        $region26: #{tpu_custom_call.1} parent=23 // pred_check_branch
          %168 = sbr.rel (%p166) target = $region28
        $region27: #{tpu_custom_call.1} parent=23 // pred_region
          %s169 = smul.u32 2, %s11
          %p170 = scmp.lt.s32.totalorder %s169, 3
          %s171 = scalar_select %p170, %s169, 3
          %s172 = smul.addr %s171, 8
          %s173 = scalar_lea.vmem %s0, %s172
          %s174 = smul.u32 2, %s11
        $region28: #{tpu_custom_call.1} parent=23 // pred_fallthru
          _
        // Predicated region
        $region29: #{tpu_custom_call.1} parent=23 // pred_check
          %p175 = pneg %p57
        $region30: #{tpu_custom_call.1} parent=23 // pred_check_branch
          %177 = sbr.rel (%p175) target = $region32
        $region31: #{tpu_custom_call.1} parent=23 // pred_region
          %s178 = smul.u32 2, %s11
          %p179 = scmp.lt.s32.totalorder %s178, 3
          %s180 = scalar_select %p179, %s178, 3
          %s181 = smul.addr %s180, 8
          %s182 = scalar_lea.vmem %s1, %s181
          %s183 = smul.u32 2, %s11
        $region32: #{tpu_custom_call.1} parent=23 // pred_fallthru
          _
      $region24: #{tpu_custom_call.1} parent=5 // pred_fallthru
        _
      %p184 = scmp.le.s32.totalorder 1, %s11
      %p185 = scmp.lt.s32.totalorder %s11, 3
      %p186 = pnand %p184, %p185
      %p187 = pneg %p186
      // Predicated region
      $region33: #{tpu_custom_call.1} parent=5 // pred_check
        _
      $region34: #{tpu_custom_call.1} parent=5 // pred_check_branch
        %189 = sbr.rel (%p186) target = $region36
      $region35: #{tpu_custom_call.1} parent=5 // pred_region
        %s190 = ssub.s32 %s11, 1
        // Predicated region
        $region37: #{tpu_custom_call.1} parent=35 // pred_check
          %p191 = pneg %p105
        $region38: #{tpu_custom_call.1} parent=35 // pred_check_branch
          %193 = sbr.rel (%p191) target = $region40
        $region39: #{tpu_custom_call.1} parent=35 // pred_region
          %194 = dma.done [#allocation3], 2048
        $region40: #{tpu_custom_call.1} parent=35 // pred_fallthru
          _
        %s195 = smul.u32 2, %s16
        %p196 = scmp.lt.s32.totalorder %s195, 3
        %s197 = scalar_select %p196, %s195, 3
        %s198 = smul.addr %s197, 8
        %s199 = scalar_lea.vmem %s0, %s198
        %p200 = pneg %p37
        %p201 = pneg %p34
        %s202 = smul.u32 2, %s16
        %p203 = scmp.lt.s32.totalorder %s202, 3
        %s204 = scalar_select %p203, %s202, 3
        %s205 = smul.addr %s204, 8
        %s206 = scalar_lea.vmem %s1, %s205
        %p207 = pneg %p63
        %p208 = pneg %p60
        %p209 = pneg %p84
        %p210 = pneg %p81
        %p211 = pneg %p105
        %p212 = pneg %p102
        %p213 = pneg %p131
        %p214 = pneg %p128
        %s215 = smul.u32 2, %s16
        %p216 = scmp.lt.s32.totalorder %s215, 3
        %s217 = scalar_select %p216, %s215, 3
        %s218 = smul.addr %s217, 8
        %s219 = scalar_lea.vmem %s4, %s218
        %s220 = smul.u32 2, %s16
        %p221 = scmp.lt.s32.totalorder %s220, 3
        %s222 = scalar_select %p221, %s220, 3
        %s223 = smul.addr %s222, 8
        %s224 = scalar_lea.vmem %s0, %s223
        %s225 = smul.u32 2, %s16
        %s226 = smul.u32 2, %s16
        %p227 = scmp.lt.s32.totalorder %s226, 3
        %s228 = scalar_select %p227, %s226, 3
        %s229 = smul.addr %s228, 8
        %s230 = scalar_lea.vmem %s1, %s229
        %s231 = smul.u32 2, %s16
        %s232 = smul.u32 2, %s16
        %p233 = scmp.lt.s32.totalorder %s232, 3
        %s234 = scalar_select %p233, %s232, 3
        %s235 = smul.addr %s234, 8
        %s236 = scalar_lea.vmem %s4, %s235
        %s237 = smul.u32 2, %s16
        %v239 = vld [vmem:[%s224] sm:$0xff]
        %v240 = vld [vmem:[%s224 + $0x8] sm:$0xff]
        %v241 = vld [vmem:[%s230] sm:$0xff]
        %v242 = vld [vmem:[%s230 + $0x8] sm:$0xff]
        %vm243 = vcmask 130048
        %v244 = vsel %vm243, %v239, 0.0
        %245 = vadd.xlane.f32.xlu0 %v244
        %v246 = vpop.xlane.xlu0 %245
        %v247 = vsel %vm243, %v240, 0.0
        %248 = vadd.xlane.f32.xlu0 %v247
        %v249 = vpop.xlane.xlu0 %248
        %v250 = vrcp.pop 16.0
        %v251 = vmul.f32 %v246, %v250
        %v252 = vmul.f32 %v249, %v250
        %v253 = vsub.f32 %v239, %v251
        %v254 = vsub.f32 %v240, %v252
        %v255 = vsel %vm243, %v241, 0.0
        %256 = vadd.xlane.f32.xlu0 %v255
        %v257 = vpop.xlane.xlu0 %256
        %v258 = vsel %vm243, %v242, 0.0
        %259 = vadd.xlane.f32.xlu0 %v258
        %v260 = vpop.xlane.xlu0 %259
        %v261 = vmul.f32 %v257, %v250
        %v262 = vmul.f32 %v260, %v250
        %v263 = vsub.f32 %v241, %v261
        %v264 = vsub.f32 %v242, %v262
        %v265 = vpack.c.bf16 %v254, %v253
        %v266 = vpack.c.bf16 %v264, %v263
        %v267 = vld [vmem:[%s2] sm:$0xff]
        %v268 = vld [vmem:[%s2 + $0x8] sm:$0xff]
        %v269 = vld [vmem:[%s2 + $0x10] sm:$0xff]
        %v270 = vld [vmem:[%s2 + $0x18] sm:$0xff]
        %v275 = vunpack.c.l.b16 %v267
        %v276 = vunpack.c.h.b16 %v267
        %v277 = vunpack.c.l.b16 %v268
        %v278 = vunpack.c.h.b16 %v268
        %v279 = vunpack.c.l.b16 %v269
        %v280 = vunpack.c.h.b16 %v269
        %v281 = vunpack.c.l.b16 %v270
        %v282 = vunpack.c.h.b16 %v270
        %v283 = vpack.c.b16 %v279, %v275
        %v284 = vpack.c.b16 %v280, %v276
        %v285 = vpack.c.b16 %v281, %v277
        %v286 = vpack.c.b16 %v282, %v278
        %v292 = vsel %vm243, %v265, 0
        %v295 = vsel %vm243, %v266, 0
        %297 = vmatprep.subr.bf16.mxu0 %v284
        %298 = vmatpush1.bf16.msra.mxu0 %v283
        %299 = vmatprep.subr.bf16.mxu0 0
        %300 = vmatpush1.bf16.msra.mxu0 0
        %301 = vmatprep.subr.bf16.mxu0 0
        %302 = vmatpush1.bf16.msra.mxu0 0
        %303 = vmatprep.subr.bf16.mxu0 0
        %304 = vmatpush1.bf16.msra.mxu0 0
        %305 = vmatprep.subr.bf16.mxu0 0
        %306 = vmatpush1.bf16.msra.mxu0 0
        %307 = vmatprep.subr.bf16.mxu0 0
        %308 = vmatpush1.bf16.msra.mxu0 0
        %309 = vmatprep.subr.bf16.mxu0 0
        %310 = vmatpush1.bf16.msra.mxu0 0
        %311 = vmatprep.subr.bf16.mxu0 0
        %312 = vmatpush1.bf16.msra.mxu0 0
        %313 = vmatprep.subr.bf16.mxu0 0
        %314 = vmatpush1.bf16.msra.mxu0 0
        %315 = vmatprep.subr.bf16.mxu0 0
        %316 = vmatpush1.bf16.msra.mxu0 0
        %317 = vmatprep.subr.bf16.mxu0 0
        %318 = vmatpush1.bf16.msra.mxu0 0
        %319 = vmatprep.subr.bf16.mxu0 0
        %320 = vmatpush1.bf16.msra.mxu0 0
        %321 = vmatprep.subr.bf16.mxu0 0
        %322 = vmatpush1.bf16.msra.mxu0 0
        %323 = vmatprep.subr.bf16.mxu0 0
        %324 = vmatpush1.bf16.msra.mxu0 0
        %325 = vmatprep.subr.bf16.mxu0 0
        %326 = vmatpush1.bf16.msra.mxu0 0
        %327 = vmatprep.subr.bf16.mxu0 0
        %328 = vmatpush1.bf16.msra.mxu0 0
        %329 = vmatprep.mubr.bf16.mxu0 0
        %330 = vmatmul.mubr.bf16.gmra.mrb[0].mxu0 %v292
        %v331 = vpop.f32.mrb[0].mxu0
        %v332 = vadd.f32 0.0, %v331
        %v333 = vpop.f32.mrb[0].mxu0
        %v334 = vadd.f32 0.0, %v333
        %v335 = vpop.f32.mrb[0].mxu0
        %v336 = vadd.f32 0.0, %v335
        %v337 = vpop.f32.mrb[0].mxu0
        %v338 = vadd.f32 0.0, %v337
        %339 = vmatprep.mubr.bf16.mxu0 0
        %340 = vmatmul.mubr.bf16.gmra.mrb[0].mxu0 %v295
        %v341 = vpop.f32.mrb[0].mxu0
        %v342 = vadd.f32 0.0, %v341
        %v343 = vpop.f32.mrb[0].mxu0
        %v344 = vadd.f32 0.0, %v343
        %v345 = vpop.f32.mrb[0].mxu0
        %v346 = vadd.f32 0.0, %v345
        %v347 = vpop.f32.mrb[0].mxu0
        %v348 = vadd.f32 0.0, %v347
        %349 = vdwg.mxu0
        %350 = vmatprep.subr.bf16.mxu0 %v286
        %351 = vmatpush1.bf16.msra.mxu0 %v285
        %352 = vmatprep.subr.bf16.mxu0 0
        %353 = vmatpush1.bf16.msra.mxu0 0
        %354 = vmatprep.subr.bf16.mxu0 0
        %355 = vmatpush1.bf16.msra.mxu0 0
        %356 = vmatprep.subr.bf16.mxu0 0
        %357 = vmatpush1.bf16.msra.mxu0 0
        %358 = vmatprep.subr.bf16.mxu0 0
        %359 = vmatpush1.bf16.msra.mxu0 0
        %360 = vmatprep.subr.bf16.mxu0 0
        %361 = vmatpush1.bf16.msra.mxu0 0
        %362 = vmatprep.subr.bf16.mxu0 0
        %363 = vmatpush1.bf16.msra.mxu0 0
        %364 = vmatprep.subr.bf16.mxu0 0
        %365 = vmatpush1.bf16.msra.mxu0 0
        %366 = vmatprep.subr.bf16.mxu0 0
        %367 = vmatpush1.bf16.msra.mxu0 0
        %368 = vmatprep.subr.bf16.mxu0 0
        %369 = vmatpush1.bf16.msra.mxu0 0
        %370 = vmatprep.subr.bf16.mxu0 0
        %371 = vmatpush1.bf16.msra.mxu0 0
        %372 = vmatprep.subr.bf16.mxu0 0
        %373 = vmatpush1.bf16.msra.mxu0 0
        %374 = vmatprep.subr.bf16.mxu0 0
        %375 = vmatpush1.bf16.msra.mxu0 0
        %376 = vmatprep.subr.bf16.mxu0 0
        %377 = vmatpush1.bf16.msra.mxu0 0
        %378 = vmatprep.subr.bf16.mxu0 0
        %379 = vmatpush1.bf16.msra.mxu0 0
        %380 = vmatprep.subr.bf16.mxu0 0
        %381 = vmatpush1.bf16.msra.mxu0 0
        %382 = vmatprep.mubr.bf16.mxu0 0
        %383 = vmatmul.mubr.bf16.gmra.mrb[0].mxu0 %v292
        %v384 = vpop.f32.mrb[0].mxu0
        %v385 = vadd.f32 0.0, %v384
        %v386 = vpop.f32.mrb[0].mxu0
        %v387 = vadd.f32 0.0, %v386
        %v388 = vpop.f32.mrb[0].mxu0
        %v389 = vadd.f32 0.0, %v388
        %v390 = vpop.f32.mrb[0].mxu0
        %v391 = vadd.f32 0.0, %v390
        %392 = vmatprep.mubr.bf16.mxu0 0
        %393 = vmatmul.mubr.bf16.gmra.mrb[0].mxu0 %v295
        %v394 = vpop.f32.mrb[0].mxu0
        %v395 = vadd.f32 0.0, %v394
        %v396 = vpop.f32.mrb[0].mxu0
        %v397 = vadd.f32 0.0, %v396
        %v398 = vpop.f32.mrb[0].mxu0
        %v399 = vadd.f32 0.0, %v398
        %v400 = vpop.f32.mrb[0].mxu0
        %v401 = vadd.f32 0.0, %v400
        %402 = vdwg.mxu0
        %v403 = vmul.f32 %v332, %v342
        %v404 = vmul.f32 %v334, %v344
        %v405 = vmul.f32 %v336, %v346
        %v406 = vmul.f32 %v338, %v348
        %v407 = vmul.f32 %v385, %v395
        %v408 = vmul.f32 %v387, %v397
        %v409 = vmul.f32 %v389, %v399
        %v410 = vmul.f32 %v391, %v401
        %v411 = vadd.f32 %v403, %v407
        %v412 = vadd.f32 %v404, %v408
        %v413 = vadd.f32 %v405, %v409
        %v414 = vadd.f32 %v406, %v410
        %v415 = vmul.f32 %v385, %v342
        %v416 = vmul.f32 %v387, %v344
        %v417 = vmul.f32 %v389, %v346
        %v418 = vmul.f32 %v391, %v348
        %v419 = vmul.f32 %v332, %v395
        %v420 = vmul.f32 %v334, %v397
        %v421 = vmul.f32 %v336, %v399
        %v422 = vmul.f32 %v338, %v401
        %v423 = vsub.f32 %v415, %v419
        %v424 = vsub.f32 %v416, %v420
        %v425 = vsub.f32 %v417, %v421
        %v426 = vsub.f32 %v418, %v422
        %v427 = vmul.f32 %v411, %v411
        %v428 = vmul.f32 %v412, %v412
        %v429 = vmul.f32 %v413, %v413
        %v430 = vmul.f32 %v414, %v414
        %v431 = vmul.f32 %v423, %v423
        %v432 = vmul.f32 %v424, %v424
        %v433 = vmul.f32 %v425, %v425
        %v434 = vmul.f32 %v426, %v426
        %v435 = vadd.f32 %v427, %v431
        %v436 = vadd.f32 %v428, %v432
        %v437 = vadd.f32 %v429, %v433
        %v438 = vadd.f32 %v430, %v434
        %v439 = vrsqrt.pop %v435
        %v440 = vmul.f32 %v435, %v439
        %vm441 = vcmp.eq.f32.partialorder %v435, inf
        %v442 = vsel %vm441, %v435, %v440
        %vm443 = vcmp.eq.f32.partialorder %v435, 0.0
        %v444 = vand.u32 %v435, 2147483648
        %v445 = vsel %vm443, %v444, %v442
        %v446 = vrsqrt.pop %v436
        %v447 = vmul.f32 %v436, %v446
        %vm448 = vcmp.eq.f32.partialorder %v436, inf
        %v449 = vsel %vm448, %v436, %v447
        %vm450 = vcmp.eq.f32.partialorder %v436, 0.0
        %v451 = vand.u32 %v436, 2147483648
        %v452 = vsel %vm450, %v451, %v449
        %v453 = vrsqrt.pop %v437
        %v454 = vmul.f32 %v437, %v453
        %vm455 = vcmp.eq.f32.partialorder %v437, inf
        %v456 = vsel %vm455, %v437, %v454
        %vm457 = vcmp.eq.f32.partialorder %v437, 0.0
        %v458 = vand.u32 %v437, 2147483648
        %v459 = vsel %vm457, %v458, %v456
        %v460 = vrsqrt.pop %v438
        %v461 = vmul.f32 %v438, %v460
        %vm462 = vcmp.eq.f32.partialorder %v438, inf
        %v463 = vsel %vm462, %v438, %v461
        %vm464 = vcmp.eq.f32.partialorder %v438, 0.0
        %v465 = vand.u32 %v438, 2147483648
        %v466 = vsel %vm464, %v465, %v463
        %v467 = vadd.f32 %v445, %v452
        %468 = vadd.xlane.f32.xlu0 %v467
        %v469 = vpop.xlane.xlu0 %468
        %v470 = vadd.f32 %v459, %v466
        %471 = vadd.xlane.f32.xlu0 %v470
        %v472 = vpop.xlane.xlu0 %471
        %473 = vadd.xlane.f32.xlu0 %v445
        %v474 = vpop.xlane.xlu0 %473
        %475 = vadd.xlane.f32.xlu0 %v459
        %v476 = vpop.xlane.xlu0 %475
        %v477 = vpack.c.bf16 %v413, %v411
        %v478 = vpack.c.bf16 %v425, %v423
        %v479 = vld [vmem:[#allocation2] sm:$0xf]
        %v480 = vld [vmem:[#allocation2 + $0x4] sm:$0xf]
        %v481 = vld [vmem:[#allocation2 + $0x8] sm:$0xf]
        %v482 = vld [vmem:[#allocation2 + $0xc] sm:$0xf]
        %v483 = vld [vmem:[#allocation2 + $0x10] sm:$0xf]
        %v484 = vld [vmem:[#allocation2 + $0x14] sm:$0xf]
        %v485 = vld [vmem:[#allocation2 + $0x18] sm:$0xf]
        %v486 = vld [vmem:[#allocation2 + $0x1c] sm:$0xf]
        %v487 = vld [vmem:[#allocation2 + $0x20] sm:$0xf]
        %v488 = vld [vmem:[#allocation2 + $0x24] sm:$0xf]
        %v489 = vld [vmem:[#allocation2 + $0x28] sm:$0xf]
        %v490 = vld [vmem:[#allocation2 + $0x2c] sm:$0xf]
        %v491 = vld [vmem:[#allocation2 + $0x30] sm:$0xf]
        %v492 = vld [vmem:[#allocation2 + $0x34] sm:$0xf]
        %v493 = vld [vmem:[#allocation2 + $0x38] sm:$0xf]
        %v494 = vld [vmem:[#allocation2 + $0x3c] sm:$0xf]
        %v495 = vld [vmem:[#allocation2 + $0x40] sm:$0xf]
        %v496 = vld [vmem:[#allocation2 + $0x44] sm:$0xf]
        %v497 = vld [vmem:[#allocation2 + $0x48] sm:$0xf]
        %v498 = vld [vmem:[#allocation2 + $0x4c] sm:$0xf]
        %v499 = vld [vmem:[#allocation2 + $0x50] sm:$0xf]
        %v500 = vld [vmem:[#allocation2 + $0x54] sm:$0xf]
        %v501 = vld [vmem:[#allocation2 + $0x58] sm:$0xf]
        %v502 = vld [vmem:[#allocation2 + $0x5c] sm:$0xf]
        %v503 = vld [vmem:[#allocation2 + $0x60] sm:$0xf]
        %v504 = vld [vmem:[#allocation2 + $0x64] sm:$0xf]
        %v505 = vld [vmem:[#allocation2 + $0x68] sm:$0xf]
        %v506 = vld [vmem:[#allocation2 + $0x6c] sm:$0xf]
        %v507 = vld [vmem:[#allocation2 + $0x70] sm:$0xf]
        %v508 = vld [vmem:[#allocation2 + $0x74] sm:$0xf]
        %v509 = vld [vmem:[#allocation2 + $0x78] sm:$0xf]
        %v510 = vld [vmem:[#allocation2 + $0x7c] sm:$0xf]
        %v543 = vunpack.c.l.b16 %v479
        %v544 = vunpack.c.l.b16 %v480
        %v545 = vunpack.c.l.b16 %v481
        %v546 = vunpack.c.l.b16 %v482
        %v547 = vunpack.c.l.b16 %v483
        %v548 = vunpack.c.l.b16 %v484
        %v549 = vunpack.c.l.b16 %v485
        %v550 = vunpack.c.l.b16 %v486
        %v551 = vunpack.c.l.b16 %v487
        %v552 = vunpack.c.l.b16 %v488
        %v553 = vunpack.c.l.b16 %v489
        %v554 = vunpack.c.l.b16 %v490
        %v555 = vunpack.c.l.b16 %v491
        %v556 = vunpack.c.l.b16 %v492
        %v557 = vunpack.c.l.b16 %v493
        %v558 = vunpack.c.l.b16 %v494
        %v559 = vunpack.c.l.b16 %v495
        %v560 = vunpack.c.l.b16 %v496
        %v561 = vunpack.c.l.b16 %v497
        %v562 = vunpack.c.l.b16 %v498
        %v563 = vunpack.c.l.b16 %v499
        %v564 = vunpack.c.l.b16 %v500
        %v565 = vunpack.c.l.b16 %v501
        %v566 = vunpack.c.l.b16 %v502
        %v567 = vunpack.c.l.b16 %v503
        %v568 = vunpack.c.l.b16 %v504
        %v569 = vunpack.c.l.b16 %v505
        %v570 = vunpack.c.l.b16 %v506
        %v571 = vunpack.c.l.b16 %v507
        %v572 = vunpack.c.l.b16 %v508
        %v573 = vunpack.c.l.b16 %v509
        %v574 = vunpack.c.l.b16 %v510
        %v575 = vpack.c.b16 %v544, %v543
        %v576 = vpack.c.b16 %v546, %v545
        %v577 = vpack.c.b16 %v548, %v547
        %v578 = vpack.c.b16 %v550, %v549
        %v579 = vpack.c.b16 %v552, %v551
        %v580 = vpack.c.b16 %v554, %v553
        %v581 = vpack.c.b16 %v556, %v555
        %v582 = vpack.c.b16 %v558, %v557
        %v583 = vpack.c.b16 %v560, %v559
        %v584 = vpack.c.b16 %v562, %v561
        %v585 = vpack.c.b16 %v564, %v563
        %v586 = vpack.c.b16 %v566, %v565
        %v587 = vpack.c.b16 %v568, %v567
        %v588 = vpack.c.b16 %v570, %v569
        %v589 = vpack.c.b16 %v572, %v571
        %v590 = vpack.c.b16 %v574, %v573
        %607 = vmatprep.subr.bf16.mxu0 0
        %608 = vmatpush1.bf16.msra.mxu0 %v575
        %609 = vmatprep.subr.bf16.mxu0 0
        %610 = vmatpush1.bf16.msra.mxu0 %v576
        %611 = vmatprep.subr.bf16.mxu0 0
        %612 = vmatpush1.bf16.msra.mxu0 %v577
        %613 = vmatprep.subr.bf16.mxu0 0
        %614 = vmatpush1.bf16.msra.mxu0 %v578
        %615 = vmatprep.subr.bf16.mxu0 0
        %616 = vmatpush1.bf16.msra.mxu0 %v579
        %617 = vmatprep.subr.bf16.mxu0 0
        %618 = vmatpush1.bf16.msra.mxu0 %v580
        %619 = vmatprep.subr.bf16.mxu0 0
        %620 = vmatpush1.bf16.msra.mxu0 %v581
        %621 = vmatprep.subr.bf16.mxu0 0
        %622 = vmatpush1.bf16.msra.mxu0 %v582
        %623 = vmatprep.subr.bf16.mxu0 0
        %624 = vmatpush1.bf16.msra.mxu0 %v583
        %625 = vmatprep.subr.bf16.mxu0 0
        %626 = vmatpush1.bf16.msra.mxu0 %v584
        %627 = vmatprep.subr.bf16.mxu0 0
        %628 = vmatpush1.bf16.msra.mxu0 %v585
        %629 = vmatprep.subr.bf16.mxu0 0
        %630 = vmatpush1.bf16.msra.mxu0 %v586
        %631 = vmatprep.subr.bf16.mxu0 0
        %632 = vmatpush1.bf16.msra.mxu0 %v587
        %633 = vmatprep.subr.bf16.mxu0 0
        %634 = vmatpush1.bf16.msra.mxu0 %v588
        %635 = vmatprep.subr.bf16.mxu0 0
        %636 = vmatpush1.bf16.msra.mxu0 %v589
        %637 = vmatprep.subr.bf16.mxu0 0
        %638 = vmatpush1.bf16.msra.mxu0 %v590
        %639 = vmatprep.mubr.bf16.mxu0 %v478
        %640 = vmatmul.mubr.bf16.gmra.mrb[0].mxu0 %v477
        %v641 = vpop.f32.mrb[0].mxu0
        %v642 = vadd.f32 0.0, %v641
        %v643 = vpop.f32.mrb[0].mxu0
        %v644 = vpop.f32.mrb[0].mxu0
        %v645 = vadd.f32 0.0, %v644
        %v646 = vpop.f32.mrb[0].mxu0
        %647 = vdwg.mxu0
        %648 = vmax.xlane.f32.xlu0 %v642
        %v649 = vpop.xlane.xlu0 %648
        %650 = vmax.xlane.f32.xlu0 %v645
        %v651 = vpop.xlane.xlu0 %650
        %v652 = vmax.f32 %v474, 1e-30
        %v653 = vmax.f32 %v476, 1e-30
        %v654 = vrcp.pop %v652
        %v655 = vrcp.pop %v653
        %v656 = vmul.f32 %v649, %v469
        %v657 = vmul.f32 %v651, %v472
        %v658 = vsub.f32 0.0, %v656
        %v659 = vsub.f32 0.0, %v657
        %v660 = vmul.f32 %v658, %v654
        %v661 = vmul.f32 %v659, %v655
        %vm662 = vcmask 7168
        %663 = vst.msk [vmem:[%s236] sm:$0xff] %vm662, %v660
        %664 = vst.msk [vmem:[%s236 + $0x8] sm:$0xff] %vm662, %v661
        %s665 = smul.u32 2, %s16
        %p666 = scmp.lt.s32.totalorder %s665, 3
        %s667 = scalar_select %p666, %s665, 3
        %s668 = smul.addr %s667, 8
        %s669 = scalar_lea.vmem %s4, %s668
        // Predicated region
        $region41: #{tpu_custom_call.1} parent=35 // pred_check
          %p670 = pneg %p128
        $region42: #{tpu_custom_call.1} parent=35 // pred_check_branch
          %672 = sbr.rel (%p670) target = $region44
        $region43: #{tpu_custom_call.1} parent=35 // pred_region
          %s673 = smul.u32 2, %s16
        $region44: #{tpu_custom_call.1} parent=35 // pred_fallthru
          _
      $region36: #{tpu_custom_call.1} parent=5 // pred_fallthru
        _
      %p674 = scmp.le.s32.totalorder 2, %s11
      // Predicated region
      $region45: #{tpu_custom_call.1} parent=5 // pred_check
        %p675 = pneg %p674
      $region46: #{tpu_custom_call.1} parent=5 // pred_check_branch
        %677 = sbr.rel (%p675) target = $region48
      $region47: #{tpu_custom_call.1} parent=5 // pred_region
        %s678 = ssub.s32 %s11, 2
        // Predicated region
        $region49: #{tpu_custom_call.1} parent=47 // pred_check
          %p679 = pneg %p134
        $region50: #{tpu_custom_call.1} parent=47 // pred_check_branch
          %681 = sbr.rel (%p679) target = $region52
        $region51: #{tpu_custom_call.1} parent=47 // pred_region
          %s682 = smul.u32 2, %s17
          %p683 = scmp.lt.s32.totalorder %s682, 3
          %s684 = scalar_select %p683, %s682, 3
          %s685 = smul.addr %s684, 8
          %s686 = scalar_lea.vmem %s4, %s685
        $region52: #{tpu_custom_call.1} parent=47 // pred_fallthru
          _
      $region48: #{tpu_custom_call.1} parent=5 // pred_fallthru
        _
    $region6: #{tpu_custom_call.1} parent=1 // loop_footer
      %s15 = sadd.s32 1, %s11
    $region7: #{tpu_custom_call.1} parent=1 // loop_footer_branch
      %10 = sbr.rel target = $region3
    $region8: #{tpu_custom_call.1} parent=1 // loop_exit
      _
    %687 = vsyncpa [#allocation3], 1
    %s688 = scalar_lea.sflag [#allocation3], 1
    %689 = vsyncpa %s688, 1

</llo_original>
